<compile_context>
chip_gen: v6e
topology: v6e:2x2x1
jax: 0.10.0
libtpu: 0.0.40
codegen_flags: <defaults>
</compile_context>

<pallas_src>
import jax
import jax.numpy as jnp
from jax import lax
from jax.experimental import pallas as pl
from jax.experimental.pallas import tpu as pltpu

NUM_CLASSES = 10
EVENT_SHAPE = (1, 28, 28)
OUT_DIM = EVENT_SHAPE[0] * EVENT_SHAPE[1] * EVENT_SHAPE[2]  # 784
CPAD = 128            # class dim padded to one lane-tile (hi half of table)
KDIM = 2 * CPAD       # contraction dim: [hi rows | lo rows]
TBL_PAD = 7 * 128     # 896: lane-dense table width (kernel stores only :784)


def _vae_forward_kernel(z_ref, lg_tbl_ref, pr_tbl_ref, logits_ref, probs_ref):
    """z_ref: (tb, 1) int32.  lg_tbl_ref / pr_tbl_ref: (256, 896) bf16 resident
    tables (rows 0..9 = bf16 hi part, rows 128..137 = bf16 lo residual).
    logits_ref / probs_ref: (tb, 784) output tiles, stored exactly once."""
    tb = z_ref.shape[0]
    z = z_ref[...]                                            # (tb, 1) int32

    # "Double one-hot": column c is 1 when (c mod 128) == z, selecting both the
    # hi and lo halves of the split table; the MXU's f32 accumulation then
    # reconstructs the f32 table row as hi[z] + lo[z] (rel err ~4e-6).
    # Out-of-range z matches nothing -> all-zero output row (no OOB access).
    col = lax.broadcasted_iota(jnp.int32, (tb, KDIM), 1)
    mask = (col & (CPAD - 1)) == z                            # (tb, 256) bool
    onehot = jnp.where(mask, 1.0, 0.0).astype(jnp.bfloat16)   # exact 0/1

    lg = jnp.dot(onehot, lg_tbl_ref[...], preferred_element_type=jnp.float32)
    pr = jnp.dot(onehot, pr_tbl_ref[...], preferred_element_type=jnp.float32)

    # Single store per output tile, unpadded 784-wide (full last dim).
    logits_ref[...] = lg[:, :OUT_DIM].astype(logits_ref.dtype)
    probs_ref[...] = pr[:, :OUT_DIM].astype(probs_ref.dtype)


def prepare_decoder_params(weight, bias):
    """One-time layout of Decoder.linear params for the kernel.

    weight: [784, 10] (PyTorch Linear layout), bias: [784].
    Returns (logits_table, probs_table), each (256, 896) bf16:
      rows [0:10]    = bf16 hi part of (W^T + b)            [resp. sigmoid(.)]
      rows [128:138] = bf16 residual (f32 value - hi part)
    so that hi[z] + lo[z] (f32 add) recovers the f32 table to ~4e-6 rel error.
    """
    w = jnp.asarray(weight, jnp.float32)              # [784, 10]
    b = jnp.asarray(bias, jnp.float32)                # [784]
    logits_tbl = w.T + b[None, :]                     # [10, 784] f32
    probs_tbl = jax.nn.sigmoid(logits_tbl)            # [10, 784] f32

    def split_pad(tbl_f32):
        hi = tbl_f32.astype(jnp.bfloat16)
        lo = (tbl_f32 - hi.astype(jnp.float32)).astype(jnp.bfloat16)
        out = jnp.zeros((KDIM, TBL_PAD), jnp.bfloat16)
        out = out.at[:NUM_CLASSES, :OUT_DIM].set(hi)
        out = out.at[CPAD:CPAD + NUM_CLASSES, :OUT_DIM].set(lo)
        return out

    return split_pad(logits_tbl), split_pad(probs_tbl)


def _choose_batch_tile(B):
    """Pick (tile_rows, num_tiles): >=2 grid steps when B > 8 so the
    "parallel" batch axis can be split across v7x's two TensorCores; tile
    capped at 512 rows (double-buffered f32 outputs ~6.4 MiB of VMEM, safe on
    v5e/v6e/v7x)."""
    rows = pl.cdiv(B, 8) * 8
    if rows <= 8:
        tb = 8
    else:
        half = pl.cdiv(rows, 2)
        tb = min(512, pl.cdiv(half, 8) * 8)
    nb = pl.cdiv(rows, tb)
    return tb, nb


def vae_forward(z, logits_table, probs_table, *, out_dtype=jnp.float32):
    """z: int [B]; logits_table / probs_table from prepare_decoder_params.

    Returns (logits, probs), each [B, 1, 28, 28] out_dtype — the parameters of
    the IndependentBernoulli distribution produced by VAE.forward.
    Set out_dtype=jnp.bfloat16 to halve HBM writeback when f32 isn't required.
    """
    B = z.shape[0]
    tb, nb = _choose_batch_tile(B)
    rows = tb * nb

    z2d = z.astype(jnp.int32).reshape(B, 1)
    if rows != B:
        # Padded rows compute class z=0 and are sliced off below.
        z2d = jnp.pad(z2d, ((0, rows - B), (0, 0)))

    logits, probs = pl.pallas_call(
        _vae_forward_kernel,
        out_shape=(
            jax.ShapeDtypeStruct((rows, OUT_DIM), out_dtype),
            jax.ShapeDtypeStruct((rows, OUT_DIM), out_dtype),
        ),
        grid=(nb,),
        in_specs=[
            pl.BlockSpec((tb, 1), lambda i: (i, 0)),              # z tile
            pl.BlockSpec((KDIM, TBL_PAD), lambda i: (0, 0)),      # resident
            pl.BlockSpec((KDIM, TBL_PAD), lambda i: (0, 0)),      # resident
        ],
        out_specs=(
            pl.BlockSpec((tb, OUT_DIM), lambda i: (i, 0)),
            pl.BlockSpec((tb, OUT_DIM), lambda i: (i, 0)),
        ),
        compiler_params=pltpu.CompilerParams(
            dimension_semantics=("parallel",)),   # megacore-shard the batch
    )(z2d, logits_table, probs_table)

    if rows != B:
        logits = logits[:B]
        probs = probs[:B]
    return (logits.reshape((B,) + EVENT_SHAPE),
            probs.reshape((B,) + EVENT_SHAPE))


def init_decoder_params(key):
    """Deterministic init of Decoder.linear = nn.Linear(10, 784), mimicking
    PyTorch's default U(-1/sqrt(fan_in), 1/sqrt(fan_in)) init."""
    kw, kb = jax.random.split(key)
    bound = 1.0 / jnp.sqrt(float(NUM_CLASSES))
    weight = jax.random.uniform(kw, (OUT_DIM, NUM_CLASSES), jnp.float32,
                                minval=-bound, maxval=bound)
    bias = jax.random.uniform(kb, (OUT_DIM,), jnp.float32,
                              minval=-bound, maxval=bound)
    return weight, bias


if __name__ == "__main__":
    key = jax.random.PRNGKey(0)
    k_param, k_z = jax.random.split(key)

    weight, bias = init_decoder_params(k_param)
    logits_table, probs_table = prepare_decoder_params(weight, bias)

    batch = 8
    z = jax.random.randint(k_z, (batch,), 0, NUM_CLASSES, dtype=jnp.int32)

    logits, probs = vae_forward(z, logits_table, probs_table)
    jax.block_until_ready((logits, probs))

    # Pure-JAX f32 reference check.
    onehot_ref = jax.nn.one_hot(z, NUM_CLASSES, dtype=jnp.float32)
    logits_ref = (onehot_ref @ weight.T + bias).reshape((batch,) + EVENT_SHAPE)
    probs_ref = jax.nn.sigmoid(logits_ref)
    assert logits.shape == (batch,) + EVENT_SHAPE
    assert probs.shape == (batch,) + EVENT_SHAPE
    assert jnp.allclose(logits, logits_ref, atol=1e-5, rtol=1e-5)
    assert jnp.allclose(probs, probs_ref, atol=1e-5, rtol=1e-5)

    # TODO(synk): a logits-only variant (Bernoulli is fully parameterized by
    # logits) would halve writeback further for downstream users that don't
    # need probs materialized.

    print("KERNEL_OK")
</pallas_src>

<mosaic_0001>
module attributes {stable_mosaic.version = 11 : i64} {
  func.func @_vae_forward_kernel(%arg0: i32, %arg1: memref<8x1xi32, #tpu.memory_space<vmem>>, %arg2: memref<256x896xbf16, #tpu.memory_space<vmem>>, %arg3: memref<256x896xbf16, #tpu.memory_space<vmem>>, %arg4: memref<8x784xf32, #tpu.memory_space<vmem>>, %arg5: memref<8x784xf32, #tpu.memory_space<vmem>>) attributes {dimension_semantics = [#tpu.dimension_semantics<parallel>], iteration_bounds = array<i64: 1>, scalar_prefetch = 0 : i64, scratch_operands = 0 : i64, tpu.core_type = #tpu.core_type<tc>, window_params = [{transform_indices = @transform_0, window_bounds = array<i64: 8, 1>}, {pipeline_mode = #tpu.pipeline_mode<synchronous>, transform_indices = @transform_1, window_bounds = array<i64: 256, 896>}, {pipeline_mode = #tpu.pipeline_mode<synchronous>, transform_indices = @transform_2, window_bounds = array<i64: 256, 896>}, {transform_indices = @transform_3, window_bounds = array<i64: 8, 784>}, {transform_indices = @transform_4, window_bounds = array<i64: 8, 784>}]} {
    %c0 = arith.constant 0 : index
    %c0_0 = arith.constant 0 : index
    %0 = vector.load %arg1[%c0, %c0_0] : memref<8x1xi32, #tpu.memory_space<vmem>>, vector<8x1xi32>
    %1 = tpu.iota {dimensions = array<i32: 1>} : vector<8x256xi32>
    %c127_i32 = arith.constant 127 : i32
    %2 = vector.broadcast %c127_i32 : i32 to vector<8x256xi32>
    %3 = arith.andi %1, %2 : vector<8x256xi32>
    %4 = vector.broadcast %0 : vector<8x1xi32> to vector<8x256xi32>
    %5 = arith.cmpi eq, %3, %4 : vector<8x256xi32>
    %cst = arith.constant 1.000000e+00 : f32
    %cst_1 = arith.constant 0.000000e+00 : f32
    %6 = vector.broadcast %cst : f32 to vector<8x256xf32>
    %7 = vector.broadcast %cst_1 : f32 to vector<8x256xf32>
    %8 = arith.select %5, %6, %7 : vector<8x256xi1>, vector<8x256xf32>
    %9 = arith.truncf %8 : vector<8x256xf32> to vector<8x256xbf16>
    %c0_2 = arith.constant 0 : index
    %c0_3 = arith.constant 0 : index
    %10 = vector.load %arg2[%c0_2, %c0_3] : memref<256x896xbf16, #tpu.memory_space<vmem>>, vector<256x896xbf16>
    %cst_4 = arith.constant dense<0.000000e+00> : vector<8x896xf32>
    %11 = tpu.matmul %9, %10, %cst_4 {dimension_numbers = #tpu.dot_dimension_numbers<[1], [0], [0], [1], [0, 0, 1, 1], [], []>} : vector<8x256xbf16>, vector<256x896xbf16>, vector<8x896xf32> -> vector<8x896xf32>
    %c0_5 = arith.constant 0 : index
    %c0_6 = arith.constant 0 : index
    %12 = vector.load %arg3[%c0_5, %c0_6] : memref<256x896xbf16, #tpu.memory_space<vmem>>, vector<256x896xbf16>
    %cst_7 = arith.constant dense<0.000000e+00> : vector<8x896xf32>
    %13 = tpu.matmul %9, %12, %cst_7 {dimension_numbers = #tpu.dot_dimension_numbers<[1], [0], [0], [1], [0, 0, 1, 1], [], []>} : vector<8x256xbf16>, vector<256x896xbf16>, vector<8x896xf32> -> vector<8x896xf32>
    %14 = vector.extract_strided_slice %11 {offsets = [0, 0], sizes = [8, 784], strides = [1, 1]} : vector<8x896xf32> to vector<8x784xf32>
    %c0_8 = arith.constant 0 : index
    %c0_9 = arith.constant 0 : index
    %15 = vector.load %arg4[%c0_8, %c0_9] : memref<8x784xf32, #tpu.memory_space<vmem>>, vector<8x784xf32>
    tpu.vector_store %arg4[%c0_8, %c0_9], %14 {strides = array<i32>} : memref<8x784xf32, #tpu.memory_space<vmem>>, vector<8x784xf32>,
    %16 = vector.extract_strided_slice %13 {offsets = [0, 0], sizes = [8, 784], strides = [1, 1]} : vector<8x896xf32> to vector<8x784xf32>
    %c0_10 = arith.constant 0 : index
    %c0_11 = arith.constant 0 : index
    %17 = vector.load %arg5[%c0_10, %c0_11] : memref<8x784xf32, #tpu.memory_space<vmem>>, vector<8x784xf32>
    tpu.vector_store %arg5[%c0_10, %c0_11], %16 {strides = array<i32>} : memref<8x784xf32, #tpu.memory_space<vmem>>, vector<8x784xf32>,
    return
  }
  func.func @transform_0(%arg0: i32) -> (i32, i32) {
    %c0_i32 = arith.constant 0 : i32
    %c0_i32_0 = arith.constant 0 : i32
    return %arg0, %c0_i32 : i32, i32
  }
  func.func @transform_1(%arg0: i32) -> (i32, i32) {
    %c0_i32 = arith.constant 0 : i32
    %c0_i32_0 = arith.constant 0 : i32
    %c0_i32_1 = arith.constant 0 : i32
    return %c0_i32, %c0_i32_0 : i32, i32
  }
  func.func @transform_2(%arg0: i32) -> (i32, i32) {
    %c0_i32 = arith.constant 0 : i32
    %c0_i32_0 = arith.constant 0 : i32
    %c0_i32_1 = arith.constant 0 : i32
    return %c0_i32, %c0_i32_0 : i32, i32
  }
  func.func @transform_3(%arg0: i32) -> (i32, i32) {
    %c0_i32 = arith.constant 0 : i32
    %c0_i32_0 = arith.constant 0 : i32
    return %arg0, %c0_i32 : i32, i32
  }
  func.func @transform_4(%arg0: i32) -> (i32, i32) {
    %c0_i32 = arith.constant 0 : i32
    %c0_i32_0 = arith.constant 0 : i32
    return %arg0, %c0_i32 : i32, i32
  }
}

</mosaic_0001>

<llo_original>
// kernel: tpu_custom_call.1
$region0: #{tpu_custom_call.1}
  #allocation0 [shape = 'u32[]', space=smem, size = 0x4, offset = 0x4, fixed_abs, tag = 'smem constant byte address 0x4 - core index']
  #allocation1 [shape = 'u32[144,128]{1,0:T(1,128)}', space=vmem, size = 0x12000, scoped, tag = 'internal scratch']
  %s0 = inlined_call_operand.vmem [shape: s32[8,1], index: 0, kind: input, shape index: {}]
  %s1 = inlined_call_operand.hbm [shape: bf16[256,896], index: 1, kind: input, shape index: {}]
  %s2 = inlined_call_operand.hbm [shape: bf16[256,896], index: 2, kind: input, shape index: {}]
  %s3 = inlined_call_operand.hbm [shape: f32[8,784], index: 3, kind: output, shape index: {0}]
  %s4 = inlined_call_operand.hbm [shape: f32[8,784], index: 4, kind: output, shape index: {1}]
  %5 = xla_tuple %s3, %s4
  %s6 = sld [smem:[#allocation0]]
  $region38: #{tpu_custom_call.1} parent=0
    _
  %s8 = ssub.s32 1, %s6
  %s9 = scalar_select 0, %s8, %s6
  $region1: #{tpu_custom_call.1} parent=0
    #allocation2 [shape = 'u8[458752]{0}', space=vmem, size = 0x70000, scoped, tag = 'input window, operand 1, single buffered']
    #allocation3 [shape = 's32[1]{0}', space=sflag, size = 0x4, scoped, tag = 'scoped memory for tpu_custom_call.1']
    #allocation4 [shape = 's32[1]{0}', space=sflag, size = 0x4, scoped, tag = 'scoped memory for tpu_custom_call.1']
    #allocation5 [shape = 'u8[458752]{0}', space=vmem, size = 0x70000, scoped, tag = 'input window, operand 2, single buffered']
    #allocation6 [shape = 's32[1]{0}', space=sflag, size = 0x4, scoped, tag = 'scoped memory for tpu_custom_call.1']
    #allocation7 [shape = 'u8[28672]{0}', space=vmem, size = 0x7000, scoped, tag = 'output window, operand 0, single buffered']
    #allocation8 [shape = 'u8[28672]{0}', space=vmem, size = 0x7000, scoped, tag = 'output window, operand 1, single buffered']
    #allocation9 [shape = 's32[1]{0}', space=sflag, size = 0x4, scoped, tag = 'scoped memory for tpu_custom_call.1']
    %10 = vsyncpa [#allocation3], 0
    %11 = vsyncpa [#allocation6], 0
    %12 = vsyncpa [#allocation4], 0
    %13 = vsyncpa [#allocation9], 0
    // Predicated region
    $region2: #{tpu_custom_call.1} parent=1 // pred_check
      _
    $region3: #{tpu_custom_call.1} parent=1 // pred_check_branch
      %15 = sbr.rel (0) target = $region5
    $region4: #{tpu_custom_call.1} parent=1 // pred_region
      _
    $region5: #{tpu_custom_call.1} parent=1 // pred_fallthru
      _
    // Predicated region
    $region6: #{tpu_custom_call.1} parent=1 // pred_check
      _
    $region7: #{tpu_custom_call.1} parent=1 // pred_check_branch
      %17 = sbr.rel (0) target = $region9
    $region8: #{tpu_custom_call.1} parent=1 // pred_region
      %s19 = ssub.s32 14336, 14336
      %20 = vsyncadd [#allocation3], %s19
      %s21 = sshll.u32 [#allocation2], 4
      %s22 = int_to_ptr.vmem [resolvable:$true] %s21
      %27 = dma.hbm_to_vmem [thread:$0]  %s1, 14336, %s22, [#allocation3], 448, 448, 28
    $region9: #{tpu_custom_call.1} parent=1 // pred_fallthru
      _
    // Predicated region
    $region10: #{tpu_custom_call.1} parent=1 // pred_check
      _
    $region11: #{tpu_custom_call.1} parent=1 // pred_check_branch
      %29 = sbr.rel (0) target = $region13
    $region12: #{tpu_custom_call.1} parent=1 // pred_region
      %s31 = ssub.s32 14336, 14336
      %32 = vsyncadd [#allocation6], %s31
      %s33 = sshll.u32 [#allocation5], 4
      %s34 = int_to_ptr.vmem [resolvable:$true] %s33
      %39 = dma.hbm_to_vmem [thread:$0]  %s2, 14336, %s34, [#allocation6], 448, 448, 28
    $region13: #{tpu_custom_call.1} parent=1 // pred_fallthru
      _
    // Predicated region
    $region14: #{tpu_custom_call.1} parent=1 // pred_check
      _
    $region15: #{tpu_custom_call.1} parent=1 // pred_check_branch
      %41 = sbr.rel (0) target = $region17
    $region16: #{tpu_custom_call.1} parent=1 // pred_region
      %42 = dma.done [#allocation3], 14336
    $region17: #{tpu_custom_call.1} parent=1 // pred_fallthru
      _
    // Predicated region
    $region18: #{tpu_custom_call.1} parent=1 // pred_check
      _
    $region19: #{tpu_custom_call.1} parent=1 // pred_check_branch
      %44 = sbr.rel (0) target = $region21
    $region20: #{tpu_custom_call.1} parent=1 // pred_region
      %45 = dma.done [#allocation6], 14336
    $region21: #{tpu_custom_call.1} parent=1 // pred_fallthru
      _
    %v47 = vld [vmem:[%s0] sm:$0xff]
    %v48 = vlaneseq
    %v49 = vand.u32 %v48, 127
    %v50 = vadd.s32 %v49, 128
    %v51 = vand.u32 %v49, 127
    %v52 = vand.u32 %v50, 127
    %53 = vset.pattern.permute.xlu0 0
    %54 = vperm.xlu0 %53, %v47
    %v55 = vpop.permute.xlu0 %54
    %vm56 = vcmp.eq.s32.totalorder %v51, %v55
    %vm57 = vcmp.eq.s32.totalorder %v52, %v55
    %v58 = vsel %vm56, 1.0, 0.0
    %v59 = vsel %vm57, 1.0, 0.0
    %v60 = vpack.c.bf16 %v58, %v58
    %v61 = vpack.c.bf16 %v59, %v59
    %v62 = vld [vmem:[#allocation2] sm:$0xff]
    %v63 = vld [vmem:[#allocation2 + $0x8] sm:$0xff]
    %v64 = vld [vmem:[#allocation2 + $0x10] sm:$0xff]
    %v65 = vld [vmem:[#allocation2 + $0x18] sm:$0xf]
    %v66 = vld [vmem:[#allocation2 + $0x1c] sm:$0xff]
    %v67 = vld [vmem:[#allocation2 + $0x24] sm:$0xff]
    %v68 = vld [vmem:[#allocation2 + $0x2c] sm:$0xff]
    %v69 = vld [vmem:[#allocation2 + $0x34] sm:$0xf]
    %v70 = vld [vmem:[#allocation2 + $0x38] sm:$0xff]
    %v71 = vld [vmem:[#allocation2 + $0x40] sm:$0xff]
    %v72 = vld [vmem:[#allocation2 + $0x48] sm:$0xff]
    %v73 = vld [vmem:[#allocation2 + $0x50] sm:$0xf]
    %v74 = vld [vmem:[#allocation2 + $0x54] sm:$0xff]
    %v75 = vld [vmem:[#allocation2 + $0x5c] sm:$0xff]
    %v76 = vld [vmem:[#allocation2 + $0x64] sm:$0xff]
    %v77 = vld [vmem:[#allocation2 + $0x6c] sm:$0xf]
    %v78 = vld [vmem:[#allocation2 + $0x70] sm:$0xff]
    %v79 = vld [vmem:[#allocation2 + $0x78] sm:$0xff]
    %v80 = vld [vmem:[#allocation2 + $0x80] sm:$0xff]
    %v81 = vld [vmem:[#allocation2 + $0x88] sm:$0xf]
    %v82 = vld [vmem:[#allocation2 + $0x8c] sm:$0xff]
    %v83 = vld [vmem:[#allocation2 + $0x94] sm:$0xff]
    %v84 = vld [vmem:[#allocation2 + $0x9c] sm:$0xff]
    %v85 = vld [vmem:[#allocation2 + $0xa4] sm:$0xf]
    %v86 = vld [vmem:[#allocation2 + $0xa8] sm:$0xff]
    %v87 = vld [vmem:[#allocation2 + $0xb0] sm:$0xff]
    %v88 = vld [vmem:[#allocation2 + $0xb8] sm:$0xff]
    %v89 = vld [vmem:[#allocation2 + $0xc0] sm:$0xf]
    %v90 = vld [vmem:[#allocation2 + $0xc4] sm:$0xff]
    %v91 = vld [vmem:[#allocation2 + $0xcc] sm:$0xff]
    %v92 = vld [vmem:[#allocation2 + $0xd4] sm:$0xff]
    %v93 = vld [vmem:[#allocation2 + $0xdc] sm:$0xf]
    %v94 = vld [vmem:[#allocation2 + $0xe0] sm:$0xff]
    %v95 = vld [vmem:[#allocation2 + $0xe8] sm:$0xff]
    %v96 = vld [vmem:[#allocation2 + $0xf0] sm:$0xff]
    %v97 = vld [vmem:[#allocation2 + $0xf8] sm:$0xf]
    %v98 = vld [vmem:[#allocation2 + $0xfc] sm:$0xff]
    %v99 = vld [vmem:[#allocation2 + $0x104] sm:$0xff]
    %v100 = vld [vmem:[#allocation2 + $0x10c] sm:$0xff]
    %v101 = vld [vmem:[#allocation2 + $0x114] sm:$0xf]
    %v102 = vld [vmem:[#allocation2 + $0x118] sm:$0xff]
    %v103 = vld [vmem:[#allocation2 + $0x120] sm:$0xff]
    %v104 = vld [vmem:[#allocation2 + $0x128] sm:$0xff]
    %v105 = vld [vmem:[#allocation2 + $0x130] sm:$0xf]
    %v106 = vld [vmem:[#allocation2 + $0x134] sm:$0xff]
    %v107 = vld [vmem:[#allocation2 + $0x13c] sm:$0xff]
    %v108 = vld [vmem:[#allocation2 + $0x144] sm:$0xff]
    %v109 = vld [vmem:[#allocation2 + $0x14c] sm:$0xf]
    %v110 = vld [vmem:[#allocation2 + $0x150] sm:$0xff]
    %v111 = vld [vmem:[#allocation2 + $0x158] sm:$0xff]
    %v112 = vld [vmem:[#allocation2 + $0x160] sm:$0xff]
    %v113 = vld [vmem:[#allocation2 + $0x168] sm:$0xf]
    %v114 = vld [vmem:[#allocation2 + $0x16c] sm:$0xff]
    %v115 = vld [vmem:[#allocation2 + $0x174] sm:$0xff]
    %v116 = vld [vmem:[#allocation2 + $0x17c] sm:$0xff]
    %v117 = vld [vmem:[#allocation2 + $0x184] sm:$0xf]
    %v118 = vld [vmem:[#allocation2 + $0x188] sm:$0xff]
    %v119 = vld [vmem:[#allocation2 + $0x190] sm:$0xff]
    %v120 = vld [vmem:[#allocation2 + $0x198] sm:$0xff]
    %v121 = vld [vmem:[#allocation2 + $0x1a0] sm:$0xf]
    %v122 = vld [vmem:[#allocation2 + $0x1a4] sm:$0xff]
    %v123 = vld [vmem:[#allocation2 + $0x1ac] sm:$0xff]
    %v124 = vld [vmem:[#allocation2 + $0x1b4] sm:$0xff]
    %v125 = vld [vmem:[#allocation2 + $0x1bc] sm:$0xf]
    %v126 = vld [vmem:[#allocation2 + $0x1c0] sm:$0xff]
    %v127 = vld [vmem:[#allocation2 + $0x1c8] sm:$0xff]
    %v128 = vld [vmem:[#allocation2 + $0x1d0] sm:$0xff]
    %v129 = vld [vmem:[#allocation2 + $0x1d8] sm:$0xf]
    %v130 = vld [vmem:[#allocation2 + $0x1dc] sm:$0xff]
    %v131 = vld [vmem:[#allocation2 + $0x1e4] sm:$0xff]
    %v132 = vld [vmem:[#allocation2 + $0x1ec] sm:$0xff]
    %v133 = vld [vmem:[#allocation2 + $0x1f4] sm:$0xf]
    %v134 = vld [vmem:[#allocation2 + $0x1f8] sm:$0xff]
    %v135 = vld [vmem:[#allocation2 + $0x200] sm:$0xff]
    %v136 = vld [vmem:[#allocation2 + $0x208] sm:$0xff]
    %v137 = vld [vmem:[#allocation2 + $0x210] sm:$0xf]
    %v138 = vld [vmem:[#allocation2 + $0x214] sm:$0xff]
    %v139 = vld [vmem:[#allocation2 + $0x21c] sm:$0xff]
    %v140 = vld [vmem:[#allocation2 + $0x224] sm:$0xff]
    %v141 = vld [vmem:[#allocation2 + $0x22c] sm:$0xf]
    %v142 = vld [vmem:[#allocation2 + $0x230] sm:$0xff]
    %v143 = vld [vmem:[#allocation2 + $0x238] sm:$0xff]
    %v144 = vld [vmem:[#allocation2 + $0x240] sm:$0xff]
    %v145 = vld [vmem:[#allocation2 + $0x248] sm:$0xf]
    %v146 = vld [vmem:[#allocation2 + $0x24c] sm:$0xff]
    %v147 = vld [vmem:[#allocation2 + $0x254] sm:$0xff]
    %v148 = vld [vmem:[#allocation2 + $0x25c] sm:$0xff]
    %v149 = vld [vmem:[#allocation2 + $0x264] sm:$0xf]
    %v150 = vld [vmem:[#allocation2 + $0x268] sm:$0xff]
    %v151 = vld [vmem:[#allocation2 + $0x270] sm:$0xff]
    %v152 = vld [vmem:[#allocation2 + $0x278] sm:$0xff]
    %v153 = vld [vmem:[#allocation2 + $0x280] sm:$0xf]
    %v154 = vld [vmem:[#allocation2 + $0x284] sm:$0xff]
    %v155 = vld [vmem:[#allocation2 + $0x28c] sm:$0xff]
    %v156 = vld [vmem:[#allocation2 + $0x294] sm:$0xff]
    %v157 = vld [vmem:[#allocation2 + $0x29c] sm:$0xf]
    %v158 = vld [vmem:[#allocation2 + $0x2a0] sm:$0xff]
    %v159 = vld [vmem:[#allocation2 + $0x2a8] sm:$0xff]
    %v160 = vld [vmem:[#allocation2 + $0x2b0] sm:$0xff]
    %v161 = vld [vmem:[#allocation2 + $0x2b8] sm:$0xf]
    %v162 = vld [vmem:[#allocation2 + $0x2bc] sm:$0xff]
    %v163 = vld [vmem:[#allocation2 + $0x2c4] sm:$0xff]
    %v164 = vld [vmem:[#allocation2 + $0x2cc] sm:$0xff]
    %v165 = vld [vmem:[#allocation2 + $0x2d4] sm:$0xf]
    %v166 = vld [vmem:[#allocation2 + $0x2d8] sm:$0xff]
    %v167 = vld [vmem:[#allocation2 + $0x2e0] sm:$0xff]
    %v168 = vld [vmem:[#allocation2 + $0x2e8] sm:$0xff]
    %v169 = vld [vmem:[#allocation2 + $0x2f0] sm:$0xf]
    %v170 = vld [vmem:[#allocation2 + $0x2f4] sm:$0xff]
    %v171 = vld [vmem:[#allocation2 + $0x2fc] sm:$0xff]
    %v172 = vld [vmem:[#allocation2 + $0x304] sm:$0xff]
    %v173 = vld [vmem:[#allocation2 + $0x30c] sm:$0xf]
    %v174 = vld [vmem:[#allocation2 + $0x310] sm:$0xff]
    %v175 = vld [vmem:[#allocation2 + $0x318] sm:$0xff]
    %v176 = vld [vmem:[#allocation2 + $0x320] sm:$0xff]
    %v177 = vld [vmem:[#allocation2 + $0x328] sm:$0xf]
    %v178 = vld [vmem:[#allocation2 + $0x32c] sm:$0xff]
    %v179 = vld [vmem:[#allocation2 + $0x334] sm:$0xff]
    %v180 = vld [vmem:[#allocation2 + $0x33c] sm:$0xff]
    %v181 = vld [vmem:[#allocation2 + $0x344] sm:$0xf]
    %v182 = vld [vmem:[#allocation2 + $0x348] sm:$0xff]
    %v183 = vld [vmem:[#allocation2 + $0x350] sm:$0xff]
    %v184 = vld [vmem:[#allocation2 + $0x358] sm:$0xff]
    %v185 = vld [vmem:[#allocation2 + $0x360] sm:$0xf]
    %v186 = vld [vmem:[#allocation2 + $0x364] sm:$0xff]
    %v187 = vld [vmem:[#allocation2 + $0x36c] sm:$0xff]
    %v188 = vld [vmem:[#allocation2 + $0x374] sm:$0xff]
    %v189 = vld [vmem:[#allocation2 + $0x37c] sm:$0xf]
    %v318 = vunpack.c.l.b16 %v62
    %v319 = vunpack.c.h.b16 %v62
    %v320 = vunpack.c.l.b16 %v63
    %v321 = vunpack.c.h.b16 %v63
    %v322 = vunpack.c.l.b16 %v64
    %v323 = vunpack.c.h.b16 %v64
    %v324 = vunpack.c.l.b16 %v65
    %v325 = vunpack.c.l.b16 %v66
    %v326 = vunpack.c.h.b16 %v66
    %v327 = vunpack.c.l.b16 %v67
    %v328 = vunpack.c.h.b16 %v67
    %v329 = vunpack.c.l.b16 %v68
    %v330 = vunpack.c.h.b16 %v68
    %v331 = vunpack.c.l.b16 %v69
    %v332 = vunpack.c.l.b16 %v70
    %v333 = vunpack.c.h.b16 %v70
    %v334 = vunpack.c.l.b16 %v71
    %v335 = vunpack.c.h.b16 %v71
    %v336 = vunpack.c.l.b16 %v72
    %v337 = vunpack.c.h.b16 %v72
    %v338 = vunpack.c.l.b16 %v73
    %v339 = vunpack.c.l.b16 %v74
    %v340 = vunpack.c.h.b16 %v74
    %v341 = vunpack.c.l.b16 %v75
    %v342 = vunpack.c.h.b16 %v75
    %v343 = vunpack.c.l.b16 %v76
    %v344 = vunpack.c.h.b16 %v76
    %v345 = vunpack.c.l.b16 %v77
    %v346 = vunpack.c.l.b16 %v78
    %v347 = vunpack.c.h.b16 %v78
    %v348 = vunpack.c.l.b16 %v79
    %v349 = vunpack.c.h.b16 %v79
    %v350 = vunpack.c.l.b16 %v80
    %v351 = vunpack.c.h.b16 %v80
    %v352 = vunpack.c.l.b16 %v81
    %v353 = vunpack.c.l.b16 %v82
    %v354 = vunpack.c.h.b16 %v82
    %v355 = vunpack.c.l.b16 %v83
    %v356 = vunpack.c.h.b16 %v83
    %v357 = vunpack.c.l.b16 %v84
    %v358 = vunpack.c.h.b16 %v84
    %v359 = vunpack.c.l.b16 %v85
    %v360 = vunpack.c.l.b16 %v86
    %v361 = vunpack.c.h.b16 %v86
    %v362 = vunpack.c.l.b16 %v87
    %v363 = vunpack.c.h.b16 %v87
    %v364 = vunpack.c.l.b16 %v88
    %v365 = vunpack.c.h.b16 %v88
    %v366 = vunpack.c.l.b16 %v89
    %v367 = vunpack.c.l.b16 %v90
    %v368 = vunpack.c.h.b16 %v90
    %v369 = vunpack.c.l.b16 %v91
    %v370 = vunpack.c.h.b16 %v91
    %v371 = vunpack.c.l.b16 %v92
    %v372 = vunpack.c.h.b16 %v92
    %v373 = vunpack.c.l.b16 %v93
    %v374 = vunpack.c.l.b16 %v94
    %v375 = vunpack.c.h.b16 %v94
    %v376 = vunpack.c.l.b16 %v95
    %v377 = vunpack.c.h.b16 %v95
    %v378 = vunpack.c.l.b16 %v96
    %v379 = vunpack.c.h.b16 %v96
    %v380 = vunpack.c.l.b16 %v97
    %v381 = vunpack.c.l.b16 %v98
    %v382 = vunpack.c.h.b16 %v98
    %v383 = vunpack.c.l.b16 %v99
    %v384 = vunpack.c.h.b16 %v99
    %v385 = vunpack.c.l.b16 %v100
    %v386 = vunpack.c.h.b16 %v100
    %v387 = vunpack.c.l.b16 %v101
    %v388 = vunpack.c.l.b16 %v102
    %v389 = vunpack.c.h.b16 %v102
    %v390 = vunpack.c.l.b16 %v103
    %v391 = vunpack.c.h.b16 %v103
    %v392 = vunpack.c.l.b16 %v104
    %v393 = vunpack.c.h.b16 %v104
    %v394 = vunpack.c.l.b16 %v105
    %v395 = vunpack.c.l.b16 %v106
    %v396 = vunpack.c.h.b16 %v106
    %v397 = vunpack.c.l.b16 %v107
    %v398 = vunpack.c.h.b16 %v107
    %v399 = vunpack.c.l.b16 %v108
    %v400 = vunpack.c.h.b16 %v108
    %v401 = vunpack.c.l.b16 %v109
    %v402 = vunpack.c.l.b16 %v110
    %v403 = vunpack.c.h.b16 %v110
    %v404 = vunpack.c.l.b16 %v111
    %v405 = vunpack.c.h.b16 %v111
    %v406 = vunpack.c.l.b16 %v112
    %v407 = vunpack.c.h.b16 %v112
    %v408 = vunpack.c.l.b16 %v113
    %v409 = vunpack.c.l.b16 %v114
    %v410 = vunpack.c.h.b16 %v114
    %v411 = vunpack.c.l.b16 %v115
    %v412 = vunpack.c.h.b16 %v115
    %v413 = vunpack.c.l.b16 %v116
    %v414 = vunpack.c.h.b16 %v116
    %v415 = vunpack.c.l.b16 %v117
    %v416 = vunpack.c.l.b16 %v118
    %v417 = vunpack.c.h.b16 %v118
    %v418 = vunpack.c.l.b16 %v119
    %v419 = vunpack.c.h.b16 %v119
    %v420 = vunpack.c.l.b16 %v120
    %v421 = vunpack.c.h.b16 %v120
    %v422 = vunpack.c.l.b16 %v121
    %v423 = vunpack.c.l.b16 %v122
    %v424 = vunpack.c.h.b16 %v122
    %v425 = vunpack.c.l.b16 %v123
    %v426 = vunpack.c.h.b16 %v123
    %v427 = vunpack.c.l.b16 %v124
    %v428 = vunpack.c.h.b16 %v124
    %v429 = vunpack.c.l.b16 %v125
    %v430 = vunpack.c.l.b16 %v126
    %v431 = vunpack.c.h.b16 %v126
    %v432 = vunpack.c.l.b16 %v127
    %v433 = vunpack.c.h.b16 %v127
    %v434 = vunpack.c.l.b16 %v128
    %v435 = vunpack.c.h.b16 %v128
    %v436 = vunpack.c.l.b16 %v129
    %v437 = vunpack.c.l.b16 %v130
    %v438 = vunpack.c.h.b16 %v130
    %v439 = vunpack.c.l.b16 %v131
    %v440 = vunpack.c.h.b16 %v131
    %v441 = vunpack.c.l.b16 %v132
    %v442 = vunpack.c.h.b16 %v132
    %v443 = vunpack.c.l.b16 %v133
    %v444 = vunpack.c.l.b16 %v134
    %v445 = vunpack.c.h.b16 %v134
    %v446 = vunpack.c.l.b16 %v135
    %v447 = vunpack.c.h.b16 %v135
    %v448 = vunpack.c.l.b16 %v136
    %v449 = vunpack.c.h.b16 %v136
    %v450 = vunpack.c.l.b16 %v137
    %v451 = vunpack.c.l.b16 %v138
    %v452 = vunpack.c.h.b16 %v138
    %v453 = vunpack.c.l.b16 %v139
    %v454 = vunpack.c.h.b16 %v139
    %v455 = vunpack.c.l.b16 %v140
    %v456 = vunpack.c.h.b16 %v140
    %v457 = vunpack.c.l.b16 %v141
    %v458 = vunpack.c.l.b16 %v142
    %v459 = vunpack.c.h.b16 %v142
    %v460 = vunpack.c.l.b16 %v143
    %v461 = vunpack.c.h.b16 %v143
    %v462 = vunpack.c.l.b16 %v144
    %v463 = vunpack.c.h.b16 %v144
    %v464 = vunpack.c.l.b16 %v145
    %v465 = vunpack.c.l.b16 %v146
    %v466 = vunpack.c.h.b16 %v146
    %v467 = vunpack.c.l.b16 %v147
    %v468 = vunpack.c.h.b16 %v147
    %v469 = vunpack.c.l.b16 %v148
    %v470 = vunpack.c.h.b16 %v148
    %v471 = vunpack.c.l.b16 %v149
    %v472 = vunpack.c.l.b16 %v150
    %v473 = vunpack.c.h.b16 %v150
    %v474 = vunpack.c.l.b16 %v151
    %v475 = vunpack.c.h.b16 %v151
    %v476 = vunpack.c.l.b16 %v152
    %v477 = vunpack.c.h.b16 %v152
    %v478 = vunpack.c.l.b16 %v153
    %v479 = vunpack.c.l.b16 %v154
    %v480 = vunpack.c.h.b16 %v154
    %v481 = vunpack.c.l.b16 %v155
    %v482 = vunpack.c.h.b16 %v155
    %v483 = vunpack.c.l.b16 %v156
    %v484 = vunpack.c.h.b16 %v156
    %v485 = vunpack.c.l.b16 %v157
    %v486 = vunpack.c.l.b16 %v158
    %v487 = vunpack.c.h.b16 %v158
    %v488 = vunpack.c.l.b16 %v159
    %v489 = vunpack.c.h.b16 %v159
    %v490 = vunpack.c.l.b16 %v160
    %v491 = vunpack.c.h.b16 %v160
    %v492 = vunpack.c.l.b16 %v161
    %v493 = vunpack.c.l.b16 %v162
    %v494 = vunpack.c.h.b16 %v162
    %v495 = vunpack.c.l.b16 %v163
    %v496 = vunpack.c.h.b16 %v163
    %v497 = vunpack.c.l.b16 %v164
    %v498 = vunpack.c.h.b16 %v164
    %v499 = vunpack.c.l.b16 %v165
    %v500 = vunpack.c.l.b16 %v166
    %v501 = vunpack.c.h.b16 %v166
    %v502 = vunpack.c.l.b16 %v167
    %v503 = vunpack.c.h.b16 %v167
    %v504 = vunpack.c.l.b16 %v168
    %v505 = vunpack.c.h.b16 %v168
    %v506 = vunpack.c.l.b16 %v169
    %v507 = vunpack.c.l.b16 %v170
    %v508 = vunpack.c.h.b16 %v170
    %v509 = vunpack.c.l.b16 %v171
    %v510 = vunpack.c.h.b16 %v171
    %v511 = vunpack.c.l.b16 %v172
    %v512 = vunpack.c.h.b16 %v172
    %v513 = vunpack.c.l.b16 %v173
    %v514 = vunpack.c.l.b16 %v174
    %v515 = vunpack.c.h.b16 %v174
    %v516 = vunpack.c.l.b16 %v175
    %v517 = vunpack.c.h.b16 %v175
    %v518 = vunpack.c.l.b16 %v176
    %v519 = vunpack.c.h.b16 %v176
    %v520 = vunpack.c.l.b16 %v177
    %v521 = vunpack.c.l.b16 %v178
    %v522 = vunpack.c.h.b16 %v178
    %v523 = vunpack.c.l.b16 %v179
    %v524 = vunpack.c.h.b16 %v179
    %v525 = vunpack.c.l.b16 %v180
    %v526 = vunpack.c.h.b16 %v180
    %v527 = vunpack.c.l.b16 %v181
    %v528 = vunpack.c.l.b16 %v182
    %v529 = vunpack.c.h.b16 %v182
    %v530 = vunpack.c.l.b16 %v183
    %v531 = vunpack.c.h.b16 %v183
    %v532 = vunpack.c.l.b16 %v184
    %v533 = vunpack.c.h.b16 %v184
    %v534 = vunpack.c.l.b16 %v185
    %v535 = vunpack.c.l.b16 %v186
    %v536 = vunpack.c.h.b16 %v186
    %v537 = vunpack.c.l.b16 %v187
    %v538 = vunpack.c.h.b16 %v187
    %v539 = vunpack.c.l.b16 %v188
    %v540 = vunpack.c.h.b16 %v188
    %v541 = vunpack.c.l.b16 %v189
    %v542 = vpack.c.b16 %v325, %v318
    %v543 = vpack.c.b16 %v326, %v319
    %v544 = vpack.c.b16 %v327, %v320
    %v545 = vpack.c.b16 %v328, %v321
    %v546 = vpack.c.b16 %v329, %v322
    %v547 = vpack.c.b16 %v330, %v323
    %v548 = vpack.c.b16 %v331, %v324
    %v549 = vpack.c.b16 %v339, %v332
    %v550 = vpack.c.b16 %v340, %v333
    %v551 = vpack.c.b16 %v341, %v334
    %v552 = vpack.c.b16 %v342, %v335
    %v553 = vpack.c.b16 %v343, %v336
    %v554 = vpack.c.b16 %v344, %v337
    %v555 = vpack.c.b16 %v345, %v338
    %v556 = vpack.c.b16 %v353, %v346
    %v557 = vpack.c.b16 %v354, %v347
    %v558 = vpack.c.b16 %v355, %v348
    %v559 = vpack.c.b16 %v356, %v349
    %v560 = vpack.c.b16 %v357, %v350
    %v561 = vpack.c.b16 %v358, %v351
    %v562 = vpack.c.b16 %v359, %v352
    %v563 = vpack.c.b16 %v367, %v360
    %v564 = vpack.c.b16 %v368, %v361
    %v565 = vpack.c.b16 %v369, %v362
    %v566 = vpack.c.b16 %v370, %v363
    %v567 = vpack.c.b16 %v371, %v364
    %v568 = vpack.c.b16 %v372, %v365
    %v569 = vpack.c.b16 %v373, %v366
    %v570 = vpack.c.b16 %v381, %v374
    %v571 = vpack.c.b16 %v382, %v375
    %v572 = vpack.c.b16 %v383, %v376
    %v573 = vpack.c.b16 %v384, %v377
    %v574 = vpack.c.b16 %v385, %v378
    %v575 = vpack.c.b16 %v386, %v379
    %v576 = vpack.c.b16 %v387, %v380
    %v577 = vpack.c.b16 %v395, %v388
    %v578 = vpack.c.b16 %v396, %v389
    %v579 = vpack.c.b16 %v397, %v390
    %v580 = vpack.c.b16 %v398, %v391
    %v581 = vpack.c.b16 %v399, %v392
    %v582 = vpack.c.b16 %v400, %v393
    %v583 = vpack.c.b16 %v401, %v394
    %v584 = vpack.c.b16 %v409, %v402
    %v585 = vpack.c.b16 %v410, %v403
    %v586 = vpack.c.b16 %v411, %v404
    %v587 = vpack.c.b16 %v412, %v405
    %v588 = vpack.c.b16 %v413, %v406
    %v589 = vpack.c.b16 %v414, %v407
    %v590 = vpack.c.b16 %v415, %v408
    %v591 = vpack.c.b16 %v423, %v416
    %v592 = vpack.c.b16 %v424, %v417
    %v593 = vpack.c.b16 %v425, %v418
    %v594 = vpack.c.b16 %v426, %v419
    %v595 = vpack.c.b16 %v427, %v420
    %v596 = vpack.c.b16 %v428, %v421
    %v597 = vpack.c.b16 %v429, %v422
    %v598 = vpack.c.b16 %v437, %v430
    %v599 = vpack.c.b16 %v438, %v431
    %v600 = vpack.c.b16 %v439, %v432
    %v601 = vpack.c.b16 %v440, %v433
    %v602 = vpack.c.b16 %v441, %v434
    %v603 = vpack.c.b16 %v442, %v435
    %v604 = vpack.c.b16 %v443, %v436
    %v605 = vpack.c.b16 %v451, %v444
    %v606 = vpack.c.b16 %v452, %v445
    %v607 = vpack.c.b16 %v453, %v446
    %v608 = vpack.c.b16 %v454, %v447
    %v609 = vpack.c.b16 %v455, %v448
    %v610 = vpack.c.b16 %v456, %v449
    %v611 = vpack.c.b16 %v457, %v450
    %v612 = vpack.c.b16 %v465, %v458
    %v613 = vpack.c.b16 %v466, %v459
    %v614 = vpack.c.b16 %v467, %v460
    %v615 = vpack.c.b16 %v468, %v461
    %v616 = vpack.c.b16 %v469, %v462
    %v617 = vpack.c.b16 %v470, %v463
    %v618 = vpack.c.b16 %v471, %v464
    %v619 = vpack.c.b16 %v479, %v472
    %v620 = vpack.c.b16 %v480, %v473
    %v621 = vpack.c.b16 %v481, %v474
    %v622 = vpack.c.b16 %v482, %v475
    %v623 = vpack.c.b16 %v483, %v476
    %v624 = vpack.c.b16 %v484, %v477
    %v625 = vpack.c.b16 %v485, %v478
    %v626 = vpack.c.b16 %v493, %v486
    %v627 = vpack.c.b16 %v494, %v487
    %v628 = vpack.c.b16 %v495, %v488
    %v629 = vpack.c.b16 %v496, %v489
    %v630 = vpack.c.b16 %v497, %v490
    %v631 = vpack.c.b16 %v498, %v491
    %v632 = vpack.c.b16 %v499, %v492
    %v633 = vpack.c.b16 %v507, %v500
    %v634 = vpack.c.b16 %v508, %v501
    %v635 = vpack.c.b16 %v509, %v502
    %v636 = vpack.c.b16 %v510, %v503
    %v637 = vpack.c.b16 %v511, %v504
    %v638 = vpack.c.b16 %v512, %v505
    %v639 = vpack.c.b16 %v513, %v506
    %v640 = vpack.c.b16 %v521, %v514
    %v641 = vpack.c.b16 %v522, %v515
    %v642 = vpack.c.b16 %v523, %v516
    %v643 = vpack.c.b16 %v524, %v517
    %v644 = vpack.c.b16 %v525, %v518
    %v645 = vpack.c.b16 %v526, %v519
    %v646 = vpack.c.b16 %v527, %v520
    %v647 = vpack.c.b16 %v535, %v528
    %v648 = vpack.c.b16 %v536, %v529
    %v649 = vpack.c.b16 %v537, %v530
    %v650 = vpack.c.b16 %v538, %v531
    %v651 = vpack.c.b16 %v539, %v532
    %v652 = vpack.c.b16 %v540, %v533
    %v653 = vpack.c.b16 %v541, %v534
    %766 = vmatprep.subr.bf16.mxu0 %v592
    %767 = vmatpush1.bf16.msra.mxu0 %v591
    %768 = vmatprep.subr.bf16.mxu0 %v585
    %769 = vmatpush1.bf16.msra.mxu0 %v584
    %770 = vmatprep.subr.bf16.mxu0 %v578
    %771 = vmatpush1.bf16.msra.mxu0 %v577
    %772 = vmatprep.subr.bf16.mxu0 %v571
    %773 = vmatpush1.bf16.msra.mxu0 %v570
    %774 = vmatprep.subr.bf16.mxu0 %v564
    %775 = vmatpush1.bf16.msra.mxu0 %v563
    %776 = vmatprep.subr.bf16.mxu0 %v557
    %777 = vmatpush1.bf16.msra.mxu0 %v556
    %778 = vmatprep.subr.bf16.mxu0 %v550
    %779 = vmatpush1.bf16.msra.mxu0 %v549
    %780 = vmatprep.subr.bf16.mxu0 %v543
    %781 = vmatpush1.bf16.msra.mxu0 %v542
    %782 = vmatprep.subr.bf16.mxu0 %v648
    %783 = vmatpush2.bf16.msra.mxu0 %v647
    %784 = vmatprep.subr.bf16.mxu0 %v641
    %785 = vmatpush2.bf16.msra.mxu0 %v640
    %786 = vmatprep.subr.bf16.mxu0 %v634
    %787 = vmatpush2.bf16.msra.mxu0 %v633
    %788 = vmatprep.subr.bf16.mxu0 %v627
    %789 = vmatpush2.bf16.msra.mxu0 %v626
    %790 = vmatprep.subr.bf16.mxu0 %v620
    %791 = vmatpush2.bf16.msra.mxu0 %v619
    %792 = vmatprep.subr.bf16.mxu0 %v613
    %793 = vmatpush2.bf16.msra.mxu0 %v612
    %794 = vmatprep.subr.bf16.mxu0 %v606
    %795 = vmatpush2.bf16.msra.mxu0 %v605
    %796 = vmatprep.subr.bf16.mxu0 %v599
    %797 = vmatpush2.bf16.msra.mxu0 %v598
    %798 = vmatprep.mubr.bf16.mxu0 %v61
    %799 = vmatmul.mubr.bf16.gmra.mxu0 %v60
    %v800 = vpop.f32.mrf.mxu0
    %v801 = vadd.f32 0.0, %v800
    %v802 = vpop.f32.mrf.mxu0
    %v803 = vadd.f32 0.0, %v802
    %v804 = vpop.f32.mrf.mxu0
    %v805 = vpop.f32.mrf.mxu0
    %806 = vdwg.mxu0
    %807 = vmatprep.subr.bf16.mxu0 %v594
    %808 = vmatpush1.bf16.msra.mxu0 %v593
    %809 = vmatprep.subr.bf16.mxu0 %v587
    %810 = vmatpush1.bf16.msra.mxu0 %v586
    %811 = vmatprep.subr.bf16.mxu0 %v580
    %812 = vmatpush1.bf16.msra.mxu0 %v579
    %813 = vmatprep.subr.bf16.mxu0 %v573
    %814 = vmatpush1.bf16.msra.mxu0 %v572
    %815 = vmatprep.subr.bf16.mxu0 %v566
    %816 = vmatpush1.bf16.msra.mxu0 %v565
    %817 = vmatprep.subr.bf16.mxu0 %v559
    %818 = vmatpush1.bf16.msra.mxu0 %v558
    %819 = vmatprep.subr.bf16.mxu0 %v552
    %820 = vmatpush1.bf16.msra.mxu0 %v551
    %821 = vmatprep.subr.bf16.mxu0 %v545
    %822 = vmatpush1.bf16.msra.mxu0 %v544
    %823 = vmatprep.subr.bf16.mxu0 %v650
    %824 = vmatpush2.bf16.msra.mxu0 %v649
    %825 = vmatprep.subr.bf16.mxu0 %v643
    %826 = vmatpush2.bf16.msra.mxu0 %v642
    %827 = vmatprep.subr.bf16.mxu0 %v636
    %828 = vmatpush2.bf16.msra.mxu0 %v635
    %829 = vmatprep.subr.bf16.mxu0 %v629
    %830 = vmatpush2.bf16.msra.mxu0 %v628
    %831 = vmatprep.subr.bf16.mxu0 %v622
    %832 = vmatpush2.bf16.msra.mxu0 %v621
    %833 = vmatprep.subr.bf16.mxu0 %v615
    %834 = vmatpush2.bf16.msra.mxu0 %v614
    %835 = vmatprep.subr.bf16.mxu0 %v608
    %836 = vmatpush2.bf16.msra.mxu0 %v607
    %837 = vmatprep.subr.bf16.mxu0 %v601
    %838 = vmatpush2.bf16.msra.mxu0 %v600
    %839 = vmatprep.mubr.bf16.mxu0 %v61
    %840 = vmatmul.mubr.bf16.gmra.mxu0 %v60
    %v841 = vpop.f32.mrf.mxu0
    %v842 = vadd.f32 0.0, %v841
    %v843 = vpop.f32.mrf.mxu0
    %v844 = vadd.f32 0.0, %v843
    %v845 = vpop.f32.mrf.mxu0
    %v846 = vpop.f32.mrf.mxu0
    %847 = vdwg.mxu0
    %848 = vmatprep.subr.bf16.mxu0 %v596
    %849 = vmatpush1.bf16.msra.mxu0 %v595
    %850 = vmatprep.subr.bf16.mxu0 %v589
    %851 = vmatpush1.bf16.msra.mxu0 %v588
    %852 = vmatprep.subr.bf16.mxu0 %v582
    %853 = vmatpush1.bf16.msra.mxu0 %v581
    %854 = vmatprep.subr.bf16.mxu0 %v575
    %855 = vmatpush1.bf16.msra.mxu0 %v574
    %856 = vmatprep.subr.bf16.mxu0 %v568
    %857 = vmatpush1.bf16.msra.mxu0 %v567
    %858 = vmatprep.subr.bf16.mxu0 %v561
    %859 = vmatpush1.bf16.msra.mxu0 %v560
    %860 = vmatprep.subr.bf16.mxu0 %v554
    %861 = vmatpush1.bf16.msra.mxu0 %v553
    %862 = vmatprep.subr.bf16.mxu0 %v547
    %863 = vmatpush1.bf16.msra.mxu0 %v546
    %864 = vmatprep.subr.bf16.mxu0 %v652
    %865 = vmatpush2.bf16.msra.mxu0 %v651
    %866 = vmatprep.subr.bf16.mxu0 %v645
    %867 = vmatpush2.bf16.msra.mxu0 %v644
    %868 = vmatprep.subr.bf16.mxu0 %v638
    %869 = vmatpush2.bf16.msra.mxu0 %v637
    %870 = vmatprep.subr.bf16.mxu0 %v631
    %871 = vmatpush2.bf16.msra.mxu0 %v630
    %872 = vmatprep.subr.bf16.mxu0 %v624
    %873 = vmatpush2.bf16.msra.mxu0 %v623
    %874 = vmatprep.subr.bf16.mxu0 %v617
    %875 = vmatpush2.bf16.msra.mxu0 %v616
    %876 = vmatprep.subr.bf16.mxu0 %v610
    %877 = vmatpush2.bf16.msra.mxu0 %v609
    %878 = vmatprep.subr.bf16.mxu0 %v603
    %879 = vmatpush2.bf16.msra.mxu0 %v602
    %880 = vmatprep.mubr.bf16.mxu0 %v61
    %881 = vmatmul.mubr.bf16.gmra.mxu0 %v60
    %v882 = vpop.f32.mrf.mxu0
    %v883 = vadd.f32 0.0, %v882
    %v884 = vpop.f32.mrf.mxu0
    %v885 = vadd.f32 0.0, %v884
    %v886 = vpop.f32.mrf.mxu0
    %v887 = vpop.f32.mrf.mxu0
    %888 = vdwg.mxu0
    %889 = vmatprep.subr.bf16.mxu0 0
    %890 = vmatpush1.bf16.msra.mxu0 %v597
    %891 = vmatprep.subr.bf16.mxu0 0
    %892 = vmatpush1.bf16.msra.mxu0 %v590
    %893 = vmatprep.subr.bf16.mxu0 0
    %894 = vmatpush1.bf16.msra.mxu0 %v583
    %895 = vmatprep.subr.bf16.mxu0 0
    %896 = vmatpush1.bf16.msra.mxu0 %v576
    %897 = vmatprep.subr.bf16.mxu0 0
    %898 = vmatpush1.bf16.msra.mxu0 %v569
    %899 = vmatprep.subr.bf16.mxu0 0
    %900 = vmatpush1.bf16.msra.mxu0 %v562
    %901 = vmatprep.subr.bf16.mxu0 0
    %902 = vmatpush1.bf16.msra.mxu0 %v555
    %903 = vmatprep.subr.bf16.mxu0 0
    %904 = vmatpush1.bf16.msra.mxu0 %v548
    %905 = vmatprep.subr.bf16.mxu0 0
    %906 = vmatpush2.bf16.msra.mxu0 %v653
    %907 = vmatprep.subr.bf16.mxu0 0
    %908 = vmatpush2.bf16.msra.mxu0 %v646
    %909 = vmatprep.subr.bf16.mxu0 0
    %910 = vmatpush2.bf16.msra.mxu0 %v639
    %911 = vmatprep.subr.bf16.mxu0 0
    %912 = vmatpush2.bf16.msra.mxu0 %v632
    %913 = vmatprep.subr.bf16.mxu0 0
    %914 = vmatpush2.bf16.msra.mxu0 %v625
    %915 = vmatprep.subr.bf16.mxu0 0
    %916 = vmatpush2.bf16.msra.mxu0 %v618
    %917 = vmatprep.subr.bf16.mxu0 0
    %918 = vmatpush2.bf16.msra.mxu0 %v611
    %919 = vmatprep.subr.bf16.mxu0 0
    %920 = vmatpush2.bf16.msra.mxu0 %v604
    %921 = vmatprep.mubr.bf16.mxu0 %v61
    %922 = vmatmul.mubr.bf16.gmra.mxu0 %v60
    %v923 = vpop.f32.mrf.mxu0
    %v924 = vadd.f32 0.0, %v923
    %v925 = vpop.f32.mrf.mxu0
    %v926 = vpop.f32.mrf.mxu0
    %v927 = vpop.f32.mrf.mxu0
    %928 = vdwg.mxu0
    %v929 = vld [vmem:[#allocation5] sm:$0xff]
    %v930 = vld [vmem:[#allocation5 + $0x8] sm:$0xff]
    %v931 = vld [vmem:[#allocation5 + $0x10] sm:$0xff]
    %v932 = vld [vmem:[#allocation5 + $0x18] sm:$0xf]
    %v933 = vld [vmem:[#allocation5 + $0x1c] sm:$0xff]
    %v934 = vld [vmem:[#allocation5 + $0x24] sm:$0xff]
    %v935 = vld [vmem:[#allocation5 + $0x2c] sm:$0xff]
    %v936 = vld [vmem:[#allocation5 + $0x34] sm:$0xf]
    %v937 = vld [vmem:[#allocation5 + $0x38] sm:$0xff]
    %v938 = vld [vmem:[#allocation5 + $0x40] sm:$0xff]
    %v939 = vld [vmem:[#allocation5 + $0x48] sm:$0xff]
    %v940 = vld [vmem:[#allocation5 + $0x50] sm:$0xf]
    %v941 = vld [vmem:[#allocation5 + $0x54] sm:$0xff]
    %v942 = vld [vmem:[#allocation5 + $0x5c] sm:$0xff]
    %v943 = vld [vmem:[#allocation5 + $0x64] sm:$0xff]
    %v944 = vld [vmem:[#allocation5 + $0x6c] sm:$0xf]
    %v945 = vld [vmem:[#allocation5 + $0x70] sm:$0xff]
    %v946 = vld [vmem:[#allocation5 + $0x78] sm:$0xff]
    %v947 = vld [vmem:[#allocation5 + $0x80] sm:$0xff]
    %v948 = vld [vmem:[#allocation5 + $0x88] sm:$0xf]
    %v949 = vld [vmem:[#allocation5 + $0x8c] sm:$0xff]
    %v950 = vld [vmem:[#allocation5 + $0x94] sm:$0xff]
    %v951 = vld [vmem:[#allocation5 + $0x9c] sm:$0xff]
    %v952 = vld [vmem:[#allocation5 + $0xa4] sm:$0xf]
    %v953 = vld [vmem:[#allocation5 + $0xa8] sm:$0xff]
    %v954 = vld [vmem:[#allocation5 + $0xb0] sm:$0xff]
    %v955 = vld [vmem:[#allocation5 + $0xb8] sm:$0xff]
    %v956 = vld [vmem:[#allocation5 + $0xc0] sm:$0xf]
    %v957 = vld [vmem:[#allocation5 + $0xc4] sm:$0xff]
    %v958 = vld [vmem:[#allocation5 + $0xcc] sm:$0xff]
    %v959 = vld [vmem:[#allocation5 + $0xd4] sm:$0xff]
    %v960 = vld [vmem:[#allocation5 + $0xdc] sm:$0xf]
    %v961 = vld [vmem:[#allocation5 + $0xe0] sm:$0xff]
    %v962 = vld [vmem:[#allocation5 + $0xe8] sm:$0xff]
    %v963 = vld [vmem:[#allocation5 + $0xf0] sm:$0xff]
    %v964 = vld [vmem:[#allocation5 + $0xf8] sm:$0xf]
    %v965 = vld [vmem:[#allocation5 + $0xfc] sm:$0xff]
    %v966 = vld [vmem:[#allocation5 + $0x104] sm:$0xff]
    %v967 = vld [vmem:[#allocation5 + $0x10c] sm:$0xff]
    %v968 = vld [vmem:[#allocation5 + $0x114] sm:$0xf]
    %v969 = vld [vmem:[#allocation5 + $0x118] sm:$0xff]
    %v970 = vld [vmem:[#allocation5 + $0x120] sm:$0xff]
    %v971 = vld [vmem:[#allocation5 + $0x128] sm:$0xff]
    %v972 = vld [vmem:[#allocation5 + $0x130] sm:$0xf]
    %v973 = vld [vmem:[#allocation5 + $0x134] sm:$0xff]
    %v974 = vld [vmem:[#allocation5 + $0x13c] sm:$0xff]
    %v975 = vld [vmem:[#allocation5 + $0x144] sm:$0xff]
    %v976 = vld [vmem:[#allocation5 + $0x14c] sm:$0xf]
    %v977 = vld [vmem:[#allocation5 + $0x150] sm:$0xff]
    %v978 = vld [vmem:[#allocation5 + $0x158] sm:$0xff]
    %v979 = vld [vmem:[#allocation5 + $0x160] sm:$0xff]
    %v980 = vld [vmem:[#allocation5 + $0x168] sm:$0xf]
    %v981 = vld [vmem:[#allocation5 + $0x16c] sm:$0xff]
    %v982 = vld [vmem:[#allocation5 + $0x174] sm:$0xff]
    %v983 = vld [vmem:[#allocation5 + $0x17c] sm:$0xff]
    %v984 = vld [vmem:[#allocation5 + $0x184] sm:$0xf]
    %v985 = vld [vmem:[#allocation5 + $0x188] sm:$0xff]
    %v986 = vld [vmem:[#allocation5 + $0x190] sm:$0xff]
    %v987 = vld [vmem:[#allocation5 + $0x198] sm:$0xff]
    %v988 = vld [vmem:[#allocation5 + $0x1a0] sm:$0xf]
    %v989 = vld [vmem:[#allocation5 + $0x1a4] sm:$0xff]
    %v990 = vld [vmem:[#allocation5 + $0x1ac] sm:$0xff]
    %v991 = vld [vmem:[#allocation5 + $0x1b4] sm:$0xff]
    %v992 = vld [vmem:[#allocation5 + $0x1bc] sm:$0xf]
    %v993 = vld [vmem:[#allocation5 + $0x1c0] sm:$0xff]
    %v994 = vld [vmem:[#allocation5 + $0x1c8] sm:$0xff]
    %v995 = vld [vmem:[#allocation5 + $0x1d0] sm:$0xff]
    %v996 = vld [vmem:[#allocation5 + $0x1d8] sm:$0xf]
    %v997 = vld [vmem:[#allocation5 + $0x1dc] sm:$0xff]
    %v998 = vld [vmem:[#allocation5 + $0x1e4] sm:$0xff]
    %v999 = vld [vmem:[#allocation5 + $0x1ec] sm:$0xff]
    %v1000 = vld [vmem:[#allocation5 + $0x1f4] sm:$0xf]
    %v1001 = vld [vmem:[#allocation5 + $0x1f8] sm:$0xff]
    %v1002 = vld [vmem:[#allocation5 + $0x200] sm:$0xff]
    %v1003 = vld [vmem:[#allocation5 + $0x208] sm:$0xff]
    %v1004 = vld [vmem:[#allocation5 + $0x210] sm:$0xf]
    %v1005 = vld [vmem:[#allocation5 + $0x214] sm:$0xff]
    %v1006 = vld [vmem:[#allocation5 + $0x21c] sm:$0xff]
    %v1007 = vld [vmem:[#allocation5 + $0x224] sm:$0xff]
    %v1008 = vld [vmem:[#allocation5 + $0x22c] sm:$0xf]
    %v1009 = vld [vmem:[#allocation5 + $0x230] sm:$0xff]
    %v1010 = vld [vmem:[#allocation5 + $0x238] sm:$0xff]
    %v1011 = vld [vmem:[#allocation5 + $0x240] sm:$0xff]
    %v1012 = vld [vmem:[#allocation5 + $0x248] sm:$0xf]
    %v1013 = vld [vmem:[#allocation5 + $0x24c] sm:$0xff]
    %v1014 = vld [vmem:[#allocation5 + $0x254] sm:$0xff]
    %v1015 = vld [vmem:[#allocation5 + $0x25c] sm:$0xff]
    %v1016 = vld [vmem:[#allocation5 + $0x264] sm:$0xf]
    %v1017 = vld [vmem:[#allocation5 + $0x268] sm:$0xff]
    %v1018 = vld [vmem:[#allocation5 + $0x270] sm:$0xff]
    %v1019 = vld [vmem:[#allocation5 + $0x278] sm:$0xff]
    %v1020 = vld [vmem:[#allocation5 + $0x280] sm:$0xf]
    %v1021 = vld [vmem:[#allocation5 + $0x284] sm:$0xff]
    %v1022 = vld [vmem:[#allocation5 + $0x28c] sm:$0xff]
    %v1023 = vld [vmem:[#allocation5 + $0x294] sm:$0xff]
    %v1024 = vld [vmem:[#allocation5 + $0x29c] sm:$0xf]
    %v1025 = vld [vmem:[#allocation5 + $0x2a0] sm:$0xff]
    %v1026 = vld [vmem:[#allocation5 + $0x2a8] sm:$0xff]
    %v1027 = vld [vmem:[#allocation5 + $0x2b0] sm:$0xff]
    %v1028 = vld [vmem:[#allocation5 + $0x2b8] sm:$0xf]
    %v1029 = vld [vmem:[#allocation5 + $0x2bc] sm:$0xff]
    %v1030 = vld [vmem:[#allocation5 + $0x2c4] sm:$0xff]
    %v1031 = vld [vmem:[#allocation5 + $0x2cc] sm:$0xff]
    %v1032 = vld [vmem:[#allocation5 + $0x2d4] sm:$0xf]
    %v1033 = vld [vmem:[#allocation5 + $0x2d8] sm:$0xff]
    %v1034 = vld [vmem:[#allocation5 + $0x2e0] sm:$0xff]
    %v1035 = vld [vmem:[#allocation5 + $0x2e8] sm:$0xff]
    %v1036 = vld [vmem:[#allocation5 + $0x2f0] sm:$0xf]
    %v1037 = vld [vmem:[#allocation5 + $0x2f4] sm:$0xff]
    %v1038 = vld [vmem:[#allocation5 + $0x2fc] sm:$0xff]
    %v1039 = vld [vmem:[#allocation5 + $0x304] sm:$0xff]
    %v1040 = vld [vmem:[#allocation5 + $0x30c] sm:$0xf]
    %v1041 = vld [vmem:[#allocation5 + $0x310] sm:$0xff]
    %v1042 = vld [vmem:[#allocation5 + $0x318] sm:$0xff]
    %v1043 = vld [vmem:[#allocation5 + $0x320] sm:$0xff]
    %v1044 = vld [vmem:[#allocation5 + $0x328] sm:$0xf]
    %v1045 = vld [vmem:[#allocation5 + $0x32c] sm:$0xff]
    %v1046 = vld [vmem:[#allocation5 + $0x334] sm:$0xff]
    %v1047 = vld [vmem:[#allocation5 + $0x33c] sm:$0xff]
    %v1048 = vld [vmem:[#allocation5 + $0x344] sm:$0xf]
    %v1049 = vld [vmem:[#allocation5 + $0x348] sm:$0xff]
    %v1050 = vld [vmem:[#allocation5 + $0x350] sm:$0xff]
    %v1051 = vld [vmem:[#allocation5 + $0x358] sm:$0xff]
    %v1052 = vld [vmem:[#allocation5 + $0x360] sm:$0xf]
    %v1053 = vld [vmem:[#allocation5 + $0x364] sm:$0xff]
    %v1054 = vld [vmem:[#allocation5 + $0x36c] sm:$0xff]
    %v1055 = vld [vmem:[#allocation5 + $0x374] sm:$0xff]
    %v1056 = vld [vmem:[#allocation5 + $0x37c] sm:$0xf]
    %v1185 = vunpack.c.l.b16 %v929
    %v1186 = vunpack.c.h.b16 %v929
    %v1187 = vunpack.c.l.b16 %v930
    %v1188 = vunpack.c.h.b16 %v930
    %v1189 = vunpack.c.l.b16 %v931
    %v1190 = vunpack.c.h.b16 %v931
    %v1191 = vunpack.c.l.b16 %v932
    %v1192 = vunpack.c.l.b16 %v933
    %v1193 = vunpack.c.h.b16 %v933
    %v1194 = vunpack.c.l.b16 %v934
    %v1195 = vunpack.c.h.b16 %v934
    %v1196 = vunpack.c.l.b16 %v935
    %v1197 = vunpack.c.h.b16 %v935
    %v1198 = vunpack.c.l.b16 %v936
    %v1199 = vunpack.c.l.b16 %v937
    %v1200 = vunpack.c.h.b16 %v937
    %v1201 = vunpack.c.l.b16 %v938
    %v1202 = vunpack.c.h.b16 %v938
    %v1203 = vunpack.c.l.b16 %v939
    %v1204 = vunpack.c.h.b16 %v939
    %v1205 = vunpack.c.l.b16 %v940
    %v1206 = vunpack.c.l.b16 %v941
    %v1207 = vunpack.c.h.b16 %v941
    %v1208 = vunpack.c.l.b16 %v942
    %v1209 = vunpack.c.h.b16 %v942
    %v1210 = vunpack.c.l.b16 %v943
    %v1211 = vunpack.c.h.b16 %v943
    %v1212 = vunpack.c.l.b16 %v944
    %v1213 = vunpack.c.l.b16 %v945
    %v1214 = vunpack.c.h.b16 %v945
    %v1215 = vunpack.c.l.b16 %v946
    %v1216 = vunpack.c.h.b16 %v946
    %v1217 = vunpack.c.l.b16 %v947
    %v1218 = vunpack.c.h.b16 %v947
    %v1219 = vunpack.c.l.b16 %v948
    %v1220 = vunpack.c.l.b16 %v949
    %v1221 = vunpack.c.h.b16 %v949
    %v1222 = vunpack.c.l.b16 %v950
    %v1223 = vunpack.c.h.b16 %v950
    %v1224 = vunpack.c.l.b16 %v951
    %v1225 = vunpack.c.h.b16 %v951
    %v1226 = vunpack.c.l.b16 %v952
    %v1227 = vunpack.c.l.b16 %v953
    %v1228 = vunpack.c.h.b16 %v953
    %v1229 = vunpack.c.l.b16 %v954
    %v1230 = vunpack.c.h.b16 %v954
    %v1231 = vunpack.c.l.b16 %v955
    %v1232 = vunpack.c.h.b16 %v955
    %v1233 = vunpack.c.l.b16 %v956
    %v1234 = vunpack.c.l.b16 %v957
    %v1235 = vunpack.c.h.b16 %v957
    %v1236 = vunpack.c.l.b16 %v958
    %v1237 = vunpack.c.h.b16 %v958
    %v1238 = vunpack.c.l.b16 %v959
    %v1239 = vunpack.c.h.b16 %v959
    %v1240 = vunpack.c.l.b16 %v960
    %v1241 = vunpack.c.l.b16 %v961
    %v1242 = vunpack.c.h.b16 %v961
    %v1243 = vunpack.c.l.b16 %v962
    %v1244 = vunpack.c.h.b16 %v962
    %v1245 = vunpack.c.l.b16 %v963
    %v1246 = vunpack.c.h.b16 %v963
    %v1247 = vunpack.c.l.b16 %v964
    %v1248 = vunpack.c.l.b16 %v965
    %v1249 = vunpack.c.h.b16 %v965
    %v1250 = vunpack.c.l.b16 %v966
    %v1251 = vunpack.c.h.b16 %v966
    %v1252 = vunpack.c.l.b16 %v967
    %v1253 = vunpack.c.h.b16 %v967
    %v1254 = vunpack.c.l.b16 %v968
    %v1255 = vunpack.c.l.b16 %v969
    %v1256 = vunpack.c.h.b16 %v969
    %v1257 = vunpack.c.l.b16 %v970
    %v1258 = vunpack.c.h.b16 %v970
    %v1259 = vunpack.c.l.b16 %v971
    %v1260 = vunpack.c.h.b16 %v971
    %v1261 = vunpack.c.l.b16 %v972
    %v1262 = vunpack.c.l.b16 %v973
    %v1263 = vunpack.c.h.b16 %v973
    %v1264 = vunpack.c.l.b16 %v974
    %v1265 = vunpack.c.h.b16 %v974
    %v1266 = vunpack.c.l.b16 %v975
    %v1267 = vunpack.c.h.b16 %v975
    %v1268 = vunpack.c.l.b16 %v976
    %v1269 = vunpack.c.l.b16 %v977
    %v1270 = vunpack.c.h.b16 %v977
    %v1271 = vunpack.c.l.b16 %v978
    %v1272 = vunpack.c.h.b16 %v978
    %v1273 = vunpack.c.l.b16 %v979
    %v1274 = vunpack.c.h.b16 %v979
    %v1275 = vunpack.c.l.b16 %v980
    %v1276 = vunpack.c.l.b16 %v981
    %v1277 = vunpack.c.h.b16 %v981
    %v1278 = vunpack.c.l.b16 %v982
    %v1279 = vunpack.c.h.b16 %v982
    %v1280 = vunpack.c.l.b16 %v983
    %v1281 = vunpack.c.h.b16 %v983
    %v1282 = vunpack.c.l.b16 %v984
    %v1283 = vunpack.c.l.b16 %v985
    %v1284 = vunpack.c.h.b16 %v985
    %v1285 = vunpack.c.l.b16 %v986
    %v1286 = vunpack.c.h.b16 %v986
    %v1287 = vunpack.c.l.b16 %v987
    %v1288 = vunpack.c.h.b16 %v987
    %v1289 = vunpack.c.l.b16 %v988
    %v1290 = vunpack.c.l.b16 %v989
    %v1291 = vunpack.c.h.b16 %v989
    %v1292 = vunpack.c.l.b16 %v990
    %v1293 = vunpack.c.h.b16 %v990
    %v1294 = vunpack.c.l.b16 %v991
    %v1295 = vunpack.c.h.b16 %v991
    %v1296 = vunpack.c.l.b16 %v992
    %v1297 = vunpack.c.l.b16 %v993
    %v1298 = vunpack.c.h.b16 %v993
    %v1299 = vunpack.c.l.b16 %v994
    %v1300 = vunpack.c.h.b16 %v994
    %v1301 = vunpack.c.l.b16 %v995
    %v1302 = vunpack.c.h.b16 %v995
    %v1303 = vunpack.c.l.b16 %v996
    %v1304 = vunpack.c.l.b16 %v997
    %v1305 = vunpack.c.h.b16 %v997
    %v1306 = vunpack.c.l.b16 %v998
    %v1307 = vunpack.c.h.b16 %v998
    %v1308 = vunpack.c.l.b16 %v999
    %v1309 = vunpack.c.h.b16 %v999
    %v1310 = vunpack.c.l.b16 %v1000
    %v1311 = vunpack.c.l.b16 %v1001
    %v1312 = vunpack.c.h.b16 %v1001
    %v1313 = vunpack.c.l.b16 %v1002
    %v1314 = vunpack.c.h.b16 %v1002
    %v1315 = vunpack.c.l.b16 %v1003
    %v1316 = vunpack.c.h.b16 %v1003
    %v1317 = vunpack.c.l.b16 %v1004
    %v1318 = vunpack.c.l.b16 %v1005
    %v1319 = vunpack.c.h.b16 %v1005
    %v1320 = vunpack.c.l.b16 %v1006
    %v1321 = vunpack.c.h.b16 %v1006
    %v1322 = vunpack.c.l.b16 %v1007
    %v1323 = vunpack.c.h.b16 %v1007
    %v1324 = vunpack.c.l.b16 %v1008
    %v1325 = vunpack.c.l.b16 %v1009
    %v1326 = vunpack.c.h.b16 %v1009
    %v1327 = vunpack.c.l.b16 %v1010
    %v1328 = vunpack.c.h.b16 %v1010
    %v1329 = vunpack.c.l.b16 %v1011
    %v1330 = vunpack.c.h.b16 %v1011
    %v1331 = vunpack.c.l.b16 %v1012
    %v1332 = vunpack.c.l.b16 %v1013
    %v1333 = vunpack.c.h.b16 %v1013
    %v1334 = vunpack.c.l.b16 %v1014
    %v1335 = vunpack.c.h.b16 %v1014
    %v1336 = vunpack.c.l.b16 %v1015
    %v1337 = vunpack.c.h.b16 %v1015
    %v1338 = vunpack.c.l.b16 %v1016
    %v1339 = vunpack.c.l.b16 %v1017
    %v1340 = vunpack.c.h.b16 %v1017
    %v1341 = vunpack.c.l.b16 %v1018
    %v1342 = vunpack.c.h.b16 %v1018
    %v1343 = vunpack.c.l.b16 %v1019
    %v1344 = vunpack.c.h.b16 %v1019
    %v1345 = vunpack.c.l.b16 %v1020
    %v1346 = vunpack.c.l.b16 %v1021
    %v1347 = vunpack.c.h.b16 %v1021
    %v1348 = vunpack.c.l.b16 %v1022
    %v1349 = vunpack.c.h.b16 %v1022
    %v1350 = vunpack.c.l.b16 %v1023
    %v1351 = vunpack.c.h.b16 %v1023
    %v1352 = vunpack.c.l.b16 %v1024
    %v1353 = vunpack.c.l.b16 %v1025
    %v1354 = vunpack.c.h.b16 %v1025
    %v1355 = vunpack.c.l.b16 %v1026
    %v1356 = vunpack.c.h.b16 %v1026
    %v1357 = vunpack.c.l.b16 %v1027
    %v1358 = vunpack.c.h.b16 %v1027
    %v1359 = vunpack.c.l.b16 %v1028
    %v1360 = vunpack.c.l.b16 %v1029
    %v1361 = vunpack.c.h.b16 %v1029
    %v1362 = vunpack.c.l.b16 %v1030
    %v1363 = vunpack.c.h.b16 %v1030
    %v1364 = vunpack.c.l.b16 %v1031
    %v1365 = vunpack.c.h.b16 %v1031
    %v1366 = vunpack.c.l.b16 %v1032
    %v1367 = vunpack.c.l.b16 %v1033
    %v1368 = vunpack.c.h.b16 %v1033
    %v1369 = vunpack.c.l.b16 %v1034
    %v1370 = vunpack.c.h.b16 %v1034
    %v1371 = vunpack.c.l.b16 %v1035
    %v1372 = vunpack.c.h.b16 %v1035
    %v1373 = vunpack.c.l.b16 %v1036
    %v1374 = vunpack.c.l.b16 %v1037
    %v1375 = vunpack.c.h.b16 %v1037
    %v1376 = vunpack.c.l.b16 %v1038
    %v1377 = vunpack.c.h.b16 %v1038
    %v1378 = vunpack.c.l.b16 %v1039
    %v1379 = vunpack.c.h.b16 %v1039
    %v1380 = vunpack.c.l.b16 %v1040
    %v1381 = vunpack.c.l.b16 %v1041
    %v1382 = vunpack.c.h.b16 %v1041
    %v1383 = vunpack.c.l.b16 %v1042
    %v1384 = vunpack.c.h.b16 %v1042
    %v1385 = vunpack.c.l.b16 %v1043
    %v1386 = vunpack.c.h.b16 %v1043
    %v1387 = vunpack.c.l.b16 %v1044
    %v1388 = vunpack.c.l.b16 %v1045
    %v1389 = vunpack.c.h.b16 %v1045
    %v1390 = vunpack.c.l.b16 %v1046
    %v1391 = vunpack.c.h.b16 %v1046
    %v1392 = vunpack.c.l.b16 %v1047
    %v1393 = vunpack.c.h.b16 %v1047
    %v1394 = vunpack.c.l.b16 %v1048
    %v1395 = vunpack.c.l.b16 %v1049
    %v1396 = vunpack.c.h.b16 %v1049
    %v1397 = vunpack.c.l.b16 %v1050
    %v1398 = vunpack.c.h.b16 %v1050
    %v1399 = vunpack.c.l.b16 %v1051
    %v1400 = vunpack.c.h.b16 %v1051
    %v1401 = vunpack.c.l.b16 %v1052
    %v1402 = vunpack.c.l.b16 %v1053
    %v1403 = vunpack.c.h.b16 %v1053
    %v1404 = vunpack.c.l.b16 %v1054
    %v1405 = vunpack.c.h.b16 %v1054
    %v1406 = vunpack.c.l.b16 %v1055
    %v1407 = vunpack.c.h.b16 %v1055
    %v1408 = vunpack.c.l.b16 %v1056
    %v1409 = vpack.c.b16 %v1192, %v1185
    %v1410 = vpack.c.b16 %v1193, %v1186
    %v1411 = vpack.c.b16 %v1194, %v1187
    %v1412 = vpack.c.b16 %v1195, %v1188
    %v1413 = vpack.c.b16 %v1196, %v1189
    %v1414 = vpack.c.b16 %v1197, %v1190
    %v1415 = vpack.c.b16 %v1198, %v1191
    %v1416 = vpack.c.b16 %v1206, %v1199
    %v1417 = vpack.c.b16 %v1207, %v1200
    %v1418 = vpack.c.b16 %v1208, %v1201
    %v1419 = vpack.c.b16 %v1209, %v1202
    %v1420 = vpack.c.b16 %v1210, %v1203
    %v1421 = vpack.c.b16 %v1211, %v1204
    %v1422 = vpack.c.b16 %v1212, %v1205
    %v1423 = vpack.c.b16 %v1220, %v1213
    %v1424 = vpack.c.b16 %v1221, %v1214
    %v1425 = vpack.c.b16 %v1222, %v1215
    %v1426 = vpack.c.b16 %v1223, %v1216
    %v1427 = vpack.c.b16 %v1224, %v1217
    %v1428 = vpack.c.b16 %v1225, %v1218
    %v1429 = vpack.c.b16 %v1226, %v1219
    %v1430 = vpack.c.b16 %v1234, %v1227
    %v1431 = vpack.c.b16 %v1235, %v1228
    %v1432 = vpack.c.b16 %v1236, %v1229
    %v1433 = vpack.c.b16 %v1237, %v1230
    %v1434 = vpack.c.b16 %v1238, %v1231
    %v1435 = vpack.c.b16 %v1239, %v1232
    %v1436 = vpack.c.b16 %v1240, %v1233
    %v1437 = vpack.c.b16 %v1248, %v1241
    %v1438 = vpack.c.b16 %v1249, %v1242
    %v1439 = vpack.c.b16 %v1250, %v1243
    %v1440 = vpack.c.b16 %v1251, %v1244
    %v1441 = vpack.c.b16 %v1252, %v1245
    %v1442 = vpack.c.b16 %v1253, %v1246
    %v1443 = vpack.c.b16 %v1254, %v1247
    %v1444 = vpack.c.b16 %v1262, %v1255
    %v1445 = vpack.c.b16 %v1263, %v1256
    %v1446 = vpack.c.b16 %v1264, %v1257
    %v1447 = vpack.c.b16 %v1265, %v1258
    %v1448 = vpack.c.b16 %v1266, %v1259
    %v1449 = vpack.c.b16 %v1267, %v1260
    %v1450 = vpack.c.b16 %v1268, %v1261
    %v1451 = vpack.c.b16 %v1276, %v1269
    %v1452 = vpack.c.b16 %v1277, %v1270
    %v1453 = vpack.c.b16 %v1278, %v1271
    %v1454 = vpack.c.b16 %v1279, %v1272
    %v1455 = vpack.c.b16 %v1280, %v1273
    %v1456 = vpack.c.b16 %v1281, %v1274
    %v1457 = vpack.c.b16 %v1282, %v1275
    %v1458 = vpack.c.b16 %v1290, %v1283
    %v1459 = vpack.c.b16 %v1291, %v1284
    %v1460 = vpack.c.b16 %v1292, %v1285
    %v1461 = vpack.c.b16 %v1293, %v1286
    %v1462 = vpack.c.b16 %v1294, %v1287
    %v1463 = vpack.c.b16 %v1295, %v1288
    %v1464 = vpack.c.b16 %v1296, %v1289
    %v1465 = vpack.c.b16 %v1304, %v1297
    %v1466 = vpack.c.b16 %v1305, %v1298
    %v1467 = vpack.c.b16 %v1306, %v1299
    %v1468 = vpack.c.b16 %v1307, %v1300
    %v1469 = vpack.c.b16 %v1308, %v1301
    %v1470 = vpack.c.b16 %v1309, %v1302
    %v1471 = vpack.c.b16 %v1310, %v1303
    %v1472 = vpack.c.b16 %v1318, %v1311
    %v1473 = vpack.c.b16 %v1319, %v1312
    %v1474 = vpack.c.b16 %v1320, %v1313
    %v1475 = vpack.c.b16 %v1321, %v1314
    %v1476 = vpack.c.b16 %v1322, %v1315
    %v1477 = vpack.c.b16 %v1323, %v1316
    %v1478 = vpack.c.b16 %v1324, %v1317
    %v1479 = vpack.c.b16 %v1332, %v1325
    %v1480 = vpack.c.b16 %v1333, %v1326
    %v1481 = vpack.c.b16 %v1334, %v1327
    %v1482 = vpack.c.b16 %v1335, %v1328
    %v1483 = vpack.c.b16 %v1336, %v1329
    %v1484 = vpack.c.b16 %v1337, %v1330
    %v1485 = vpack.c.b16 %v1338, %v1331
    %v1486 = vpack.c.b16 %v1346, %v1339
    %v1487 = vpack.c.b16 %v1347, %v1340
    %v1488 = vpack.c.b16 %v1348, %v1341
    %v1489 = vpack.c.b16 %v1349, %v1342
    %v1490 = vpack.c.b16 %v1350, %v1343
    %v1491 = vpack.c.b16 %v1351, %v1344
    %v1492 = vpack.c.b16 %v1352, %v1345
    %v1493 = vpack.c.b16 %v1360, %v1353
    %v1494 = vpack.c.b16 %v1361, %v1354
    %v1495 = vpack.c.b16 %v1362, %v1355
    %v1496 = vpack.c.b16 %v1363, %v1356
    %v1497 = vpack.c.b16 %v1364, %v1357
    %v1498 = vpack.c.b16 %v1365, %v1358
    %v1499 = vpack.c.b16 %v1366, %v1359
    %v1500 = vpack.c.b16 %v1374, %v1367
    %v1501 = vpack.c.b16 %v1375, %v1368
    %v1502 = vpack.c.b16 %v1376, %v1369
    %v1503 = vpack.c.b16 %v1377, %v1370
    %v1504 = vpack.c.b16 %v1378, %v1371
    %v1505 = vpack.c.b16 %v1379, %v1372
    %v1506 = vpack.c.b16 %v1380, %v1373
    %v1507 = vpack.c.b16 %v1388, %v1381
    %v1508 = vpack.c.b16 %v1389, %v1382
    %v1509 = vpack.c.b16 %v1390, %v1383
    %v1510 = vpack.c.b16 %v1391, %v1384
    %v1511 = vpack.c.b16 %v1392, %v1385
    %v1512 = vpack.c.b16 %v1393, %v1386
    %v1513 = vpack.c.b16 %v1394, %v1387
    %v1514 = vpack.c.b16 %v1402, %v1395
    %v1515 = vpack.c.b16 %v1403, %v1396
    %v1516 = vpack.c.b16 %v1404, %v1397
    %v1517 = vpack.c.b16 %v1405, %v1398
    %v1518 = vpack.c.b16 %v1406, %v1399
    %v1519 = vpack.c.b16 %v1407, %v1400
    %v1520 = vpack.c.b16 %v1408, %v1401
    %1633 = vmatprep.subr.bf16.mxu0 %v1459
    %1634 = vmatpush1.bf16.msra.mxu0 %v1458
    %1635 = vmatprep.subr.bf16.mxu0 %v1452
    %1636 = vmatpush1.bf16.msra.mxu0 %v1451
    %1637 = vmatprep.subr.bf16.mxu0 %v1445
    %1638 = vmatpush1.bf16.msra.mxu0 %v1444
    %1639 = vmatprep.subr.bf16.mxu0 %v1438
    %1640 = vmatpush1.bf16.msra.mxu0 %v1437
    %1641 = vmatprep.subr.bf16.mxu0 %v1431
    %1642 = vmatpush1.bf16.msra.mxu0 %v1430
    %1643 = vmatprep.subr.bf16.mxu0 %v1424
    %1644 = vmatpush1.bf16.msra.mxu0 %v1423
    %1645 = vmatprep.subr.bf16.mxu0 %v1417
    %1646 = vmatpush1.bf16.msra.mxu0 %v1416
    %1647 = vmatprep.subr.bf16.mxu0 %v1410
    %1648 = vmatpush1.bf16.msra.mxu0 %v1409
    %1649 = vmatprep.subr.bf16.mxu0 %v1515
    %1650 = vmatpush2.bf16.msra.mxu0 %v1514
    %1651 = vmatprep.subr.bf16.mxu0 %v1508
    %1652 = vmatpush2.bf16.msra.mxu0 %v1507
    %1653 = vmatprep.subr.bf16.mxu0 %v1501
    %1654 = vmatpush2.bf16.msra.mxu0 %v1500
    %1655 = vmatprep.subr.bf16.mxu0 %v1494
    %1656 = vmatpush2.bf16.msra.mxu0 %v1493
    %1657 = vmatprep.subr.bf16.mxu0 %v1487
    %1658 = vmatpush2.bf16.msra.mxu0 %v1486
    %1659 = vmatprep.subr.bf16.mxu0 %v1480
    %1660 = vmatpush2.bf16.msra.mxu0 %v1479
    %1661 = vmatprep.subr.bf16.mxu0 %v1473
    %1662 = vmatpush2.bf16.msra.mxu0 %v1472
    %1663 = vmatprep.subr.bf16.mxu0 %v1466
    %1664 = vmatpush2.bf16.msra.mxu0 %v1465
    %1665 = vmatprep.mubr.bf16.mxu0 %v61
    %1666 = vmatmul.mubr.bf16.gmra.mxu0 %v60
    %v1667 = vpop.f32.mrf.mxu0
    %v1668 = vadd.f32 0.0, %v1667
    %v1669 = vpop.f32.mrf.mxu0
    %v1670 = vadd.f32 0.0, %v1669
    %v1671 = vpop.f32.mrf.mxu0
    %v1672 = vpop.f32.mrf.mxu0
    %1673 = vdwg.mxu0
    %1674 = vmatprep.subr.bf16.mxu0 %v1461
    %1675 = vmatpush1.bf16.msra.mxu0 %v1460
    %1676 = vmatprep.subr.bf16.mxu0 %v1454
    %1677 = vmatpush1.bf16.msra.mxu0 %v1453
    %1678 = vmatprep.subr.bf16.mxu0 %v1447
    %1679 = vmatpush1.bf16.msra.mxu0 %v1446
    %1680 = vmatprep.subr.bf16.mxu0 %v1440
    %1681 = vmatpush1.bf16.msra.mxu0 %v1439
    %1682 = vmatprep.subr.bf16.mxu0 %v1433
    %1683 = vmatpush1.bf16.msra.mxu0 %v1432
    %1684 = vmatprep.subr.bf16.mxu0 %v1426
    %1685 = vmatpush1.bf16.msra.mxu0 %v1425
    %1686 = vmatprep.subr.bf16.mxu0 %v1419
    %1687 = vmatpush1.bf16.msra.mxu0 %v1418
    %1688 = vmatprep.subr.bf16.mxu0 %v1412
    %1689 = vmatpush1.bf16.msra.mxu0 %v1411
    %1690 = vmatprep.subr.bf16.mxu0 %v1517
    %1691 = vmatpush2.bf16.msra.mxu0 %v1516
    %1692 = vmatprep.subr.bf16.mxu0 %v1510
    %1693 = vmatpush2.bf16.msra.mxu0 %v1509
    %1694 = vmatprep.subr.bf16.mxu0 %v1503
    %1695 = vmatpush2.bf16.msra.mxu0 %v1502
    %1696 = vmatprep.subr.bf16.mxu0 %v1496
    %1697 = vmatpush2.bf16.msra.mxu0 %v1495
    %1698 = vmatprep.subr.bf16.mxu0 %v1489
    %1699 = vmatpush2.bf16.msra.mxu0 %v1488
    %1700 = vmatprep.subr.bf16.mxu0 %v1482
    %1701 = vmatpush2.bf16.msra.mxu0 %v1481
    %1702 = vmatprep.subr.bf16.mxu0 %v1475
    %1703 = vmatpush2.bf16.msra.mxu0 %v1474
    %1704 = vmatprep.subr.bf16.mxu0 %v1468
    %1705 = vmatpush2.bf16.msra.mxu0 %v1467
    %1706 = vmatprep.mubr.bf16.mxu0 %v61
    %1707 = vmatmul.mubr.bf16.gmra.mxu0 %v60
    %v1708 = vpop.f32.mrf.mxu0
    %v1709 = vadd.f32 0.0, %v1708
    %v1710 = vpop.f32.mrf.mxu0
    %v1711 = vadd.f32 0.0, %v1710
    %v1712 = vpop.f32.mrf.mxu0
    %v1713 = vpop.f32.mrf.mxu0
    %1714 = vdwg.mxu0
    %1715 = vmatprep.subr.bf16.mxu0 %v1463
    %1716 = vmatpush1.bf16.msra.mxu0 %v1462
    %1717 = vmatprep.subr.bf16.mxu0 %v1456
    %1718 = vmatpush1.bf16.msra.mxu0 %v1455
    %1719 = vmatprep.subr.bf16.mxu0 %v1449
    %1720 = vmatpush1.bf16.msra.mxu0 %v1448
    %1721 = vmatprep.subr.bf16.mxu0 %v1442
    %1722 = vmatpush1.bf16.msra.mxu0 %v1441
    %1723 = vmatprep.subr.bf16.mxu0 %v1435
    %1724 = vmatpush1.bf16.msra.mxu0 %v1434
    %1725 = vmatprep.subr.bf16.mxu0 %v1428
    %1726 = vmatpush1.bf16.msra.mxu0 %v1427
    %1727 = vmatprep.subr.bf16.mxu0 %v1421
    %1728 = vmatpush1.bf16.msra.mxu0 %v1420
    %1729 = vmatprep.subr.bf16.mxu0 %v1414
    %1730 = vmatpush1.bf16.msra.mxu0 %v1413
    %1731 = vmatprep.subr.bf16.mxu0 %v1519
    %1732 = vmatpush2.bf16.msra.mxu0 %v1518
    %1733 = vmatprep.subr.bf16.mxu0 %v1512
    %1734 = vmatpush2.bf16.msra.mxu0 %v1511
    %1735 = vmatprep.subr.bf16.mxu0 %v1505
    %1736 = vmatpush2.bf16.msra.mxu0 %v1504
    %1737 = vmatprep.subr.bf16.mxu0 %v1498
    %1738 = vmatpush2.bf16.msra.mxu0 %v1497
    %1739 = vmatprep.subr.bf16.mxu0 %v1491
    %1740 = vmatpush2.bf16.msra.mxu0 %v1490
    %1741 = vmatprep.subr.bf16.mxu0 %v1484
    %1742 = vmatpush2.bf16.msra.mxu0 %v1483
    %1743 = vmatprep.subr.bf16.mxu0 %v1477
    %1744 = vmatpush2.bf16.msra.mxu0 %v1476
    %1745 = vmatprep.subr.bf16.mxu0 %v1470
    %1746 = vmatpush2.bf16.msra.mxu0 %v1469
    %1747 = vmatprep.mubr.bf16.mxu0 %v61
    %1748 = vmatmul.mubr.bf16.gmra.mxu0 %v60
    %v1749 = vpop.f32.mrf.mxu0
    %v1750 = vadd.f32 0.0, %v1749
    %v1751 = vpop.f32.mrf.mxu0
    %v1752 = vadd.f32 0.0, %v1751
    %v1753 = vpop.f32.mrf.mxu0
    %v1754 = vpop.f32.mrf.mxu0
    %1755 = vdwg.mxu0
    %1756 = vmatprep.subr.bf16.mxu0 0
    %1757 = vmatpush1.bf16.msra.mxu0 %v1464
    %1758 = vmatprep.subr.bf16.mxu0 0
    %1759 = vmatpush1.bf16.msra.mxu0 %v1457
    %1760 = vmatprep.subr.bf16.mxu0 0
    %1761 = vmatpush1.bf16.msra.mxu0 %v1450
    %1762 = vmatprep.subr.bf16.mxu0 0
    %1763 = vmatpush1.bf16.msra.mxu0 %v1443
    %1764 = vmatprep.subr.bf16.mxu0 0
    %1765 = vmatpush1.bf16.msra.mxu0 %v1436
    %1766 = vmatprep.subr.bf16.mxu0 0
    %1767 = vmatpush1.bf16.msra.mxu0 %v1429
    %1768 = vmatprep.subr.bf16.mxu0 0
    %1769 = vmatpush1.bf16.msra.mxu0 %v1422
    %1770 = vmatprep.subr.bf16.mxu0 0
    %1771 = vmatpush1.bf16.msra.mxu0 %v1415
    %1772 = vmatprep.subr.bf16.mxu0 0
    %1773 = vmatpush2.bf16.msra.mxu0 %v1520
    %1774 = vmatprep.subr.bf16.mxu0 0
    %1775 = vmatpush2.bf16.msra.mxu0 %v1513
    %1776 = vmatprep.subr.bf16.mxu0 0
    %1777 = vmatpush2.bf16.msra.mxu0 %v1506
    %1778 = vmatprep.subr.bf16.mxu0 0
    %1779 = vmatpush2.bf16.msra.mxu0 %v1499
    %1780 = vmatprep.subr.bf16.mxu0 0
    %1781 = vmatpush2.bf16.msra.mxu0 %v1492
    %1782 = vmatprep.subr.bf16.mxu0 0
    %1783 = vmatpush2.bf16.msra.mxu0 %v1485
    %1784 = vmatprep.subr.bf16.mxu0 0
    %1785 = vmatpush2.bf16.msra.mxu0 %v1478
    %1786 = vmatprep.subr.bf16.mxu0 0
    %1787 = vmatpush2.bf16.msra.mxu0 %v1471
    %1788 = vmatprep.mubr.bf16.mxu0 %v61
    %1789 = vmatmul.mubr.bf16.gmra.mxu0 %v60
    %v1790 = vpop.f32.mrf.mxu0
    %v1791 = vadd.f32 0.0, %v1790
    %v1792 = vpop.f32.mrf.mxu0
    %v1793 = vpop.f32.mrf.mxu0
    %v1794 = vpop.f32.mrf.mxu0
    %1795 = vdwg.mxu0
    %1796 = vst [vmem:[#allocation7] sm:$0xff] %v801
    %1797 = vst [vmem:[#allocation7 + $0x8] sm:$0xff] %v803
    %1798 = vst [vmem:[#allocation7 + $0x10] sm:$0xff] %v842
    %1799 = vst [vmem:[#allocation7 + $0x18] sm:$0xff] %v844
    %1800 = vst [vmem:[#allocation7 + $0x20] sm:$0xff] %v883
    %1801 = vst [vmem:[#allocation7 + $0x28] sm:$0xff] %v885
    %vm1802 = vcmask 130048
    %1803 = vst.msk [vmem:[#allocation7 + $0x30] sm:$0xff] %vm1802, %v924
    %1804 = vst [vmem:[#allocation8] sm:$0xff] %v1668
    %1805 = vst [vmem:[#allocation8 + $0x8] sm:$0xff] %v1670
    %1806 = vst [vmem:[#allocation8 + $0x10] sm:$0xff] %v1709
    %1807 = vst [vmem:[#allocation8 + $0x18] sm:$0xff] %v1711
    %1808 = vst [vmem:[#allocation8 + $0x20] sm:$0xff] %v1750
    %1809 = vst [vmem:[#allocation8 + $0x28] sm:$0xff] %v1752
    %1810 = vst.msk [vmem:[#allocation8 + $0x30] sm:$0xff] %vm1802, %v1791
    // Predicated region
    $region22: #{tpu_custom_call.1} parent=1 // pred_check
      _
    $region23: #{tpu_custom_call.1} parent=1 // pred_check_branch
      %1812 = sbr.rel (0) target = $region25
    $region24: #{tpu_custom_call.1} parent=1 // pred_region
      %s1814 = ssub.s32 896, 896
      %1815 = vsyncadd [#allocation4], %s1814
      %s1817 = sshll.u32 [#allocation7], 4
      %s1818 = int_to_ptr.vmem [resolvable:$true] %s1817
      %1820 = dma.vmem_to_hbm [thread:$0]  %s1818, 896, %s3, [#allocation4]
    $region25: #{tpu_custom_call.1} parent=1 // pred_fallthru
      _
    // Predicated region
    $region26: #{tpu_custom_call.1} parent=1 // pred_check
      _
    $region27: #{tpu_custom_call.1} parent=1 // pred_check_branch
      %1822 = sbr.rel (0) target = $region29
    $region28: #{tpu_custom_call.1} parent=1 // pred_region
      %s1824 = ssub.s32 896, 896
      %1825 = vsyncadd [#allocation9], %s1824
      %s1827 = sshll.u32 [#allocation8], 4
      %s1828 = int_to_ptr.vmem [resolvable:$true] %s1827
      %1830 = dma.vmem_to_hbm [thread:$0]  %s1828, 896, %s4, [#allocation9]
    $region29: #{tpu_custom_call.1} parent=1 // pred_fallthru
      _
    // Predicated region
    $region30: #{tpu_custom_call.1} parent=1 // pred_check
      _
    $region31: #{tpu_custom_call.1} parent=1 // pred_check_branch
      %1832 = sbr.rel (0) target = $region33
    $region32: #{tpu_custom_call.1} parent=1 // pred_region
      %1833 = dma.done [#allocation4], 896
    $region33: #{tpu_custom_call.1} parent=1 // pred_fallthru
      _
    // Predicated region
    $region34: #{tpu_custom_call.1} parent=1 // pred_check
      _
    $region35: #{tpu_custom_call.1} parent=1 // pred_check_branch
      %1835 = sbr.rel (0) target = $region37
    $region36: #{tpu_custom_call.1} parent=1 // pred_region
      %1836 = dma.done [#allocation9], 896
    $region37: #{tpu_custom_call.1} parent=1 // pred_fallthru
      _
    %1837 = vsyncpa [#allocation3], 1
    %1838 = vsyncpa [#allocation6], 1
    %1839 = vsyncpa [#allocation4], 1
    %1840 = vsyncpa [#allocation9], 1

</llo_original>
